<compile_context>
chip_gen: v6e
topology: v6e:2x2x1
jax: 0.10.0
libtpu: 0.0.40
codegen_flags: <defaults>
</compile_context>

<pallas_src>
import functools

import jax
import jax.numpy as jnp
import numpy as np
from jax import lax
from jax.experimental import pallas as pl
from jax.experimental.pallas import tpu as pltpu

KSIZE = 3   # module defaults: kernel_size=3, stride=1, padding=1
PAD = 1


def _shift_flat(x, d, hw):
    """Return s with s[:, q] = x[:, (q + d) % hw].

    Wrap-around / row-crossing positions are exactly the positions the caller
    masks to zero, so a cyclic shift is sufficient.
    """
    if d == 0:
        return x
    shift = (-d) % hw
    if hw % 128 == 0:
        # Static lane rotate on the XLU -- no relayout temporaries.
        return pltpu.roll(x, shift, axis=1)
    # Fallback for spatial sizes whose flat extent is not a lane multiple.
    return jnp.roll(x, shift, axis=1)


def _tap_masks(hh, ww, H, W):
    """Per-3x3-tap validity mask on the flat (1, H*W) grid (None == all valid)."""
    masks = []
    for kh in range(KSIZE):
        dh = kh - PAD
        for kw in range(KSIZE):
            dw = kw - PAD
            conds = []
            if dh < 0:
                conds.append(hh >= -dh)
            elif dh > 0:
                conds.append(hh < H - dh)
            if dw < 0:
                conds.append(ww >= -dw)
            elif dw > 0:
                conds.append(ww < W - dw)
            m = None
            for c in conds:
                m = c if m is None else jnp.logical_and(m, c)
            masks.append(m)
    return masks


def _conv_image(x_img, w_ref, masks, H, W, Cout):
    """3x3 / stride-1 / pad-1 conv of one image, accumulated lane-dense.

    x_img: (Cin, H*W) f32 (flat spatial on lanes); w_ref: (9, Cout, Cin).
    Returns (Cout, H*W) f32.
    """
    HW = H * W
    acc = jnp.zeros((Cout, HW), jnp.float32)
    for kh in range(KSIZE):
        dh = kh - PAD
        for kw in range(KSIZE):
            dw = kw - PAD
            t = kh * KSIZE + kw
            src = _shift_flat(x_img, dh * W + dw, HW)
            if masks[t] is not None:
                src = jnp.where(masks[t], src, 0.0)
            acc = acc + jnp.dot(w_ref[t], src,
                                preferred_element_type=jnp.float32)
    return acc


def _stats_kernel(x_ref, w_ref, hh_ref, ww_ref, stat_ref, *, nb, H, W, Cout):
    """Pass 1: per-image BN partial statistics of the conv output (no y writeback)."""
    masks = _tap_masks(hh_ref[...], ww_ref[...], H, W)
    inv_hw = 1.0 / (H * W)
    for i in range(nb):
        y = _conv_image(x_ref[i], w_ref, masks, H, W, Cout)      # (Cout, HW)
        s = jnp.sum(y, axis=1, keepdims=True)                     # (Cout, 1)
        mu = s * inv_hw
        m2 = jnp.sum((y - mu) ** 2, axis=1, keepdims=True)        # centered 2nd moment
        stat_ref[i] = jnp.concatenate([s, m2], axis=1)            # single (Cout, 2) store


def _apply_kernel(x_ref, w_ref, hh_ref, ww_ref, shift_ref, o_ref, *, nb, H, W, Cout):
    """Pass 2: recompute the conv with the BN scale folded into the weights, add shift."""
    masks = _tap_masks(hh_ref[...], ww_ref[...], H, W)
    for i in range(nb):
        y = _conv_image(x_ref[i], w_ref, masks, H, W, Cout)
        o_ref[i] = (y + shift_ref[...]).astype(o_ref.dtype)


def conv_bn(x_nchw, w_oihw, gamma, beta, eps=1e-5, images_per_block=None):
    N, Cin, H, W = x_nchw.shape
    Cout = w_oihw.shape[0]
    HW = H * W

    # Free, metadata-only reshape: NCHW -> (N, Cin, H*W) puts spatial on lanes.
    x_flat = x_nchw.reshape(N, Cin, HW).astype(jnp.float32)
    # (Cout, Cin, KH, KW) -> (KH*KW, Cout, Cin) so the kernel computes
    # dot((Cout, Cin), (Cin, HW)) and accumulates lane-dense.
    w_taps = jnp.transpose(w_oihw.astype(jnp.float32), (2, 3, 0, 1)).reshape(
        KSIZE * KSIZE, Cout, Cin)

    # Precomputed row/col index of every flat spatial position (avoids integer
    # div/mod inside the kernel); constant block index -> DMA'd once, resident.
    q = np.arange(HW, dtype=np.int32)
    hh_idx = jnp.asarray((q // W).reshape(1, HW))
    ww_idx = jnp.asarray((q % W).reshape(1, HW))

    # Images per grid step: big enough to amortize per-step overhead, small
    # enough that double-buffered blocks stay well inside v7x's 64 MiB VMEM.
    # TODO(synk): for multi-megapixel images (single-image block >> a few MiB)
    # add overlapping row tiles; unnecessary at these channel counts / sizes.
    if images_per_block is None:
        per_image_bytes = (Cin + Cout) * HW * 4
        nb = max(1, min(N, (4 * 1024 * 1024) // max(per_image_bytes, 1)))
        while N % nb:
            nb -= 1
    else:
        nb = images_per_block
        assert N % nb == 0
    grid = (N // nb,)

    block_bytes = nb * (Cin + Cout) * HW * 4
    vmem_bytes = int(min(48 * 1024 * 1024, max(16 * 1024 * 1024, 4 * block_bytes)))
    cparams = pltpu.CompilerParams(dimension_semantics=("parallel",),
                                   vmem_limit_bytes=vmem_bytes)

    x_spec = pl.BlockSpec((nb, Cin, HW), lambda b: (b, 0, 0))
    w_spec = pl.BlockSpec((KSIZE * KSIZE, Cout, Cin), lambda b: (0, 0, 0))
    idx_spec = pl.BlockSpec((1, HW), lambda b: (0, 0))

    # ---- Pass 1: conv + per-image BN partials (tiny packed output, no y round-trip).
    stats = pl.pallas_call(
        functools.partial(_stats_kernel, nb=nb, H=H, W=W, Cout=Cout),
        out_shape=jax.ShapeDtypeStruct((N, Cout, 2), jnp.float32),
        grid_spec=pltpu.PrefetchScalarGridSpec(
            num_scalar_prefetch=0,
            grid=grid,
            in_specs=[x_spec, w_spec, idx_spec, idx_spec],
            out_specs=pl.BlockSpec((nb, Cout, 2), lambda b: (b, 0, 0)),
        ),
        compiler_params=cparams,
    )(x_flat, w_taps, hh_idx, ww_idx)

    # ---- Finalize batch statistics (parallel-Welford combine of per-image chunks).
    s_img = stats[:, :, 0]                       # (N, Cout) per-image sums
    m2_img = stats[:, :, 1]                      # (N, Cout) centered second moments
    npix = float(HW)
    total = float(N * HW)
    mean_img = s_img / npix
    mean = jnp.sum(s_img, axis=0) / total        # (Cout,)
    var = (jnp.sum(m2_img, axis=0)
           + npix * jnp.sum((mean_img - mean[None, :]) ** 2, axis=0)) / total
    inv = gamma.astype(jnp.float32) / jnp.sqrt(var + eps)
    shift = (beta.astype(jnp.float32) - mean * inv).reshape(Cout, 1)
    w_scaled = w_taps * inv.reshape(1, Cout, 1)  # fold BN scale into the conv weights
    # TODO(synk): running_mean/running_var buffer updates (PyTorch uses unbiased
    # variance there) are training-side bookkeeping and are not materialized.

    # ---- Pass 2: recompute conv with scaled weights, add shift, write final output.
    out_flat = pl.pallas_call(
        functools.partial(_apply_kernel, nb=nb, H=H, W=W, Cout=Cout),
        out_shape=jax.ShapeDtypeStruct((N, Cout, HW), jnp.float32),
        grid_spec=pltpu.PrefetchScalarGridSpec(
            num_scalar_prefetch=0,
            grid=grid,
            in_specs=[x_spec, w_spec, idx_spec, idx_spec,
                      pl.BlockSpec((Cout, 1), lambda b: (0, 0))],
            out_specs=pl.BlockSpec((nb, Cout, HW), lambda b: (b, 0, 0)),
        ),
        compiler_params=cparams,
    )(x_flat, w_scaled, hh_idx, ww_idx, shift)

    # Free reshape: the kernel already wrote channel-major, lane-dense data.
    return out_flat.reshape(N, Cout, H, W)


if __name__ == "__main__":
    key = jax.random.PRNGKey(0)
    kx, kw, kg, kb = jax.random.split(key, 4)

    N, Cin, Cout, H, W = 2, 4, 8, 16, 16
    x = jax.random.normal(kx, (N, Cin, H, W), jnp.float32)
    w = jax.random.normal(kw, (Cout, Cin, KSIZE, KSIZE), jnp.float32) * 0.1
    gamma = 1.0 + 0.1 * jax.random.normal(kg, (Cout,), jnp.float32)
    beta = 0.1 * jax.random.normal(kb, (Cout,), jnp.float32)

    out = jax.block_until_ready(conv_bn(x, w, gamma, beta))

    # Pure-JAX reference (same semantics as PyTorch training-mode ConvBn).
    dn = lax.conv_dimension_numbers(x.shape, w.shape, ("NCHW", "OIHW", "NCHW"))
    y_ref = lax.conv_general_dilated(x, w, (1, 1), ((PAD, PAD), (PAD, PAD)),
                                     dimension_numbers=dn)
    mean = y_ref.mean(axis=(0, 2, 3), keepdims=True)
    var = y_ref.var(axis=(0, 2, 3), keepdims=True)
    ref = (gamma.reshape(1, -1, 1, 1) * (y_ref - mean) / jnp.sqrt(var + 1e-5)
           + beta.reshape(1, -1, 1, 1))

    np.testing.assert_allclose(np.asarray(out), np.asarray(ref),
                               rtol=2e-3, atol=2e-3)
    print("KERNEL_OK")
</pallas_src>

<mosaic_0001>
module attributes {stable_mosaic.version = 11 : i64} {
  func.func @_stats_kernel(%arg0: i32, %arg1: memref<2x4x256xf32, #tpu.memory_space<vmem>>, %arg2: memref<9x8x4xf32, #tpu.memory_space<vmem>>, %arg3: memref<1x256xi32, #tpu.memory_space<vmem>>, %arg4: memref<1x256xi32, #tpu.memory_space<vmem>>, %arg5: memref<2x8x2xf32, #tpu.memory_space<vmem>>) attributes {dimension_semantics = [#tpu.dimension_semantics<parallel>], iteration_bounds = array<i64: 1>, scalar_prefetch = 0 : i64, scratch_operands = 0 : i64, tpu.core_type = #tpu.core_type<tc>, window_params = [{transform_indices = @transform_0, window_bounds = array<i64: 2, 4, 256>}, {pipeline_mode = #tpu.pipeline_mode<synchronous>, transform_indices = @transform_1, window_bounds = array<i64: 9, 8, 4>}, {pipeline_mode = #tpu.pipeline_mode<synchronous>, transform_indices = @transform_2, window_bounds = array<i64: 1, 256>}, {pipeline_mode = #tpu.pipeline_mode<synchronous>, transform_indices = @transform_3, window_bounds = array<i64: 1, 256>}, {transform_indices = @transform_4, window_bounds = array<i64: 2, 8, 2>}]} {
    %c0 = arith.constant 0 : index
    %c0_0 = arith.constant 0 : index
    %0 = vector.load %arg3[%c0, %c0_0] : memref<1x256xi32, #tpu.memory_space<vmem>>, vector<1x256xi32>
    %c0_1 = arith.constant 0 : index
    %c0_2 = arith.constant 0 : index
    %1 = vector.load %arg4[%c0_1, %c0_2] : memref<1x256xi32, #tpu.memory_space<vmem>>, vector<1x256xi32>
    %c1_i32 = arith.constant 1 : i32
    %2 = vector.broadcast %c1_i32 : i32 to vector<1x256xi32>
    %3 = arith.cmpi sge, %0, %2 : vector<1x256xi32>
    %c1_i32_3 = arith.constant 1 : i32
    %4 = vector.broadcast %c1_i32_3 : i32 to vector<1x256xi32>
    %5 = arith.cmpi sge, %1, %4 : vector<1x256xi32>
    %6 = arith.andi %3, %5 : vector<1x256xi1>
    %c1_i32_4 = arith.constant 1 : i32
    %7 = vector.broadcast %c1_i32_4 : i32 to vector<1x256xi32>
    %8 = arith.cmpi sge, %0, %7 : vector<1x256xi32>
    %c1_i32_5 = arith.constant 1 : i32
    %9 = vector.broadcast %c1_i32_5 : i32 to vector<1x256xi32>
    %10 = arith.cmpi sge, %0, %9 : vector<1x256xi32>
    %c15_i32 = arith.constant 15 : i32
    %11 = vector.broadcast %c15_i32 : i32 to vector<1x256xi32>
    %12 = arith.cmpi slt, %1, %11 : vector<1x256xi32>
    %13 = arith.andi %10, %12 : vector<1x256xi1>
    %c1_i32_6 = arith.constant 1 : i32
    %14 = vector.broadcast %c1_i32_6 : i32 to vector<1x256xi32>
    %15 = arith.cmpi sge, %1, %14 : vector<1x256xi32>
    %c15_i32_7 = arith.constant 15 : i32
    %16 = vector.broadcast %c15_i32_7 : i32 to vector<1x256xi32>
    %17 = arith.cmpi slt, %1, %16 : vector<1x256xi32>
    %c15_i32_8 = arith.constant 15 : i32
    %18 = vector.broadcast %c15_i32_8 : i32 to vector<1x256xi32>
    %19 = arith.cmpi slt, %0, %18 : vector<1x256xi32>
    %c1_i32_9 = arith.constant 1 : i32
    %20 = vector.broadcast %c1_i32_9 : i32 to vector<1x256xi32>
    %21 = arith.cmpi sge, %1, %20 : vector<1x256xi32>
    %22 = arith.andi %19, %21 : vector<1x256xi1>
    %c15_i32_10 = arith.constant 15 : i32
    %23 = vector.broadcast %c15_i32_10 : i32 to vector<1x256xi32>
    %24 = arith.cmpi slt, %0, %23 : vector<1x256xi32>
    %c15_i32_11 = arith.constant 15 : i32
    %25 = vector.broadcast %c15_i32_11 : i32 to vector<1x256xi32>
    %26 = arith.cmpi slt, %0, %25 : vector<1x256xi32>
    %c15_i32_12 = arith.constant 15 : i32
    %27 = vector.broadcast %c15_i32_12 : i32 to vector<1x256xi32>
    %28 = arith.cmpi slt, %1, %27 : vector<1x256xi32>
    %29 = arith.andi %26, %28 : vector<1x256xi1>
    %c0_13 = arith.constant 0 : index
    %c0_14 = arith.constant 0 : index
    %c0_15 = arith.constant 0 : index
    %30 = vector.load %arg1[%c0_13, %c0_14, %c0_15] : memref<2x4x256xf32, #tpu.memory_space<vmem>>, vector<1x4x256xf32>
    %31 = vector.shape_cast %30 : vector<1x4x256xf32> to vector<4x256xf32>
    %cst = arith.constant 0.000000e+00 : f32
    %32 = vector.broadcast %cst : f32 to vector<8x256xf32>
    %c17_i32 = arith.constant 17 : i32
    %33 = tpu.dynamic_rotate %31 by %c17_i32 dim 1 : vector<4x256xf32>, i32 -> vector<4x256xf32>
    %cst_16 = arith.constant 0.000000e+00 : f32
    %34 = vector.shape_cast %6 : vector<1x256xi1> to vector<1x256xi1>
    %35 = vector.broadcast %34 : vector<1x256xi1> to vector<4x256xi1>
    %36 = vector.broadcast %cst_16 : f32 to vector<4x256xf32>
    %37 = arith.select %35, %33, %36 : vector<4x256xi1>, vector<4x256xf32>
    %c0_17 = arith.constant 0 : index
    %c0_18 = arith.constant 0 : index
    %c0_19 = arith.constant 0 : index
    %38 = vector.load %arg2[%c0_17, %c0_18, %c0_19] : memref<9x8x4xf32, #tpu.memory_space<vmem>>, vector<1x8x4xf32>
    %39 = vector.shape_cast %38 : vector<1x8x4xf32> to vector<8x4xf32>
    %cst_20 = arith.constant dense<0.000000e+00> : vector<8x256xf32>
    %40 = tpu.matmul %39, %37, %cst_20 {dimension_numbers = #tpu.dot_dimension_numbers<[1], [0], [0], [1], [0, 0, 1, 1], [], []>} : vector<8x4xf32>, vector<4x256xf32>, vector<8x256xf32> -> vector<8x256xf32>
    %41 = arith.addf %32, %40 : vector<8x256xf32>
    %c16_i32 = arith.constant 16 : i32
    %42 = tpu.dynamic_rotate %31 by %c16_i32 dim 1 : vector<4x256xf32>, i32 -> vector<4x256xf32>
    %cst_21 = arith.constant 0.000000e+00 : f32
    %43 = vector.shape_cast %8 : vector<1x256xi1> to vector<1x256xi1>
    %44 = vector.broadcast %43 : vector<1x256xi1> to vector<4x256xi1>
    %45 = vector.broadcast %cst_21 : f32 to vector<4x256xf32>
    %46 = arith.select %44, %42, %45 : vector<4x256xi1>, vector<4x256xf32>
    %c1 = arith.constant 1 : index
    %c0_22 = arith.constant 0 : index
    %c0_23 = arith.constant 0 : index
    %47 = vector.load %arg2[%c1, %c0_22, %c0_23] : memref<9x8x4xf32, #tpu.memory_space<vmem>>, vector<1x8x4xf32>
    %48 = vector.shape_cast %47 : vector<1x8x4xf32> to vector<8x4xf32>
    %cst_24 = arith.constant dense<0.000000e+00> : vector<8x256xf32>
    %49 = tpu.matmul %48, %46, %cst_24 {dimension_numbers = #tpu.dot_dimension_numbers<[1], [0], [0], [1], [0, 0, 1, 1], [], []>} : vector<8x4xf32>, vector<4x256xf32>, vector<8x256xf32> -> vector<8x256xf32>
    %50 = arith.addf %41, %49 : vector<8x256xf32>
    %c15_i32_25 = arith.constant 15 : i32
    %51 = tpu.dynamic_rotate %31 by %c15_i32_25 dim 1 : vector<4x256xf32>, i32 -> vector<4x256xf32>
    %cst_26 = arith.constant 0.000000e+00 : f32
    %52 = vector.shape_cast %13 : vector<1x256xi1> to vector<1x256xi1>
    %53 = vector.broadcast %52 : vector<1x256xi1> to vector<4x256xi1>
    %54 = vector.broadcast %cst_26 : f32 to vector<4x256xf32>
    %55 = arith.select %53, %51, %54 : vector<4x256xi1>, vector<4x256xf32>
    %c2 = arith.constant 2 : index
    %c0_27 = arith.constant 0 : index
    %c0_28 = arith.constant 0 : index
    %56 = vector.load %arg2[%c2, %c0_27, %c0_28] : memref<9x8x4xf32, #tpu.memory_space<vmem>>, vector<1x8x4xf32>
    %57 = vector.shape_cast %56 : vector<1x8x4xf32> to vector<8x4xf32>
    %cst_29 = arith.constant dense<0.000000e+00> : vector<8x256xf32>
    %58 = tpu.matmul %57, %55, %cst_29 {dimension_numbers = #tpu.dot_dimension_numbers<[1], [0], [0], [1], [0, 0, 1, 1], [], []>} : vector<8x4xf32>, vector<4x256xf32>, vector<8x256xf32> -> vector<8x256xf32>
    %59 = arith.addf %50, %58 : vector<8x256xf32>
    %c1_i32_30 = arith.constant 1 : i32
    %60 = tpu.dynamic_rotate %31 by %c1_i32_30 dim 1 : vector<4x256xf32>, i32 -> vector<4x256xf32>
    %cst_31 = arith.constant 0.000000e+00 : f32
    %61 = vector.shape_cast %15 : vector<1x256xi1> to vector<1x256xi1>
    %62 = vector.broadcast %61 : vector<1x256xi1> to vector<4x256xi1>
    %63 = vector.broadcast %cst_31 : f32 to vector<4x256xf32>
    %64 = arith.select %62, %60, %63 : vector<4x256xi1>, vector<4x256xf32>
    %c3 = arith.constant 3 : index
    %c0_32 = arith.constant 0 : index
    %c0_33 = arith.constant 0 : index
    %65 = vector.load %arg2[%c3, %c0_32, %c0_33] : memref<9x8x4xf32, #tpu.memory_space<vmem>>, vector<1x8x4xf32>
    %66 = vector.shape_cast %65 : vector<1x8x4xf32> to vector<8x4xf32>
    %cst_34 = arith.constant dense<0.000000e+00> : vector<8x256xf32>
    %67 = tpu.matmul %66, %64, %cst_34 {dimension_numbers = #tpu.dot_dimension_numbers<[1], [0], [0], [1], [0, 0, 1, 1], [], []>} : vector<8x4xf32>, vector<4x256xf32>, vector<8x256xf32> -> vector<8x256xf32>
    %68 = arith.addf %59, %67 : vector<8x256xf32>
    %c4 = arith.constant 4 : index
    %c0_35 = arith.constant 0 : index
    %c0_36 = arith.constant 0 : index
    %69 = vector.load %arg2[%c4, %c0_35, %c0_36] : memref<9x8x4xf32, #tpu.memory_space<vmem>>, vector<1x8x4xf32>
    %70 = vector.shape_cast %69 : vector<1x8x4xf32> to vector<8x4xf32>
    %cst_37 = arith.constant dense<0.000000e+00> : vector<8x256xf32>
    %71 = tpu.matmul %70, %31, %cst_37 {dimension_numbers = #tpu.dot_dimension_numbers<[1], [0], [0], [1], [0, 0, 1, 1], [], []>} : vector<8x4xf32>, vector<4x256xf32>, vector<8x256xf32> -> vector<8x256xf32>
    %72 = arith.addf %68, %71 : vector<8x256xf32>
    %c255_i32 = arith.constant 255 : i32
    %73 = tpu.dynamic_rotate %31 by %c255_i32 dim 1 : vector<4x256xf32>, i32 -> vector<4x256xf32>
    %cst_38 = arith.constant 0.000000e+00 : f32
    %74 = vector.shape_cast %17 : vector<1x256xi1> to vector<1x256xi1>
    %75 = vector.broadcast %74 : vector<1x256xi1> to vector<4x256xi1>
    %76 = vector.broadcast %cst_38 : f32 to vector<4x256xf32>
    %77 = arith.select %75, %73, %76 : vector<4x256xi1>, vector<4x256xf32>
    %c5 = arith.constant 5 : index
    %c0_39 = arith.constant 0 : index
    %c0_40 = arith.constant 0 : index
    %78 = vector.load %arg2[%c5, %c0_39, %c0_40] : memref<9x8x4xf32, #tpu.memory_space<vmem>>, vector<1x8x4xf32>
    %79 = vector.shape_cast %78 : vector<1x8x4xf32> to vector<8x4xf32>
    %cst_41 = arith.constant dense<0.000000e+00> : vector<8x256xf32>
    %80 = tpu.matmul %79, %77, %cst_41 {dimension_numbers = #tpu.dot_dimension_numbers<[1], [0], [0], [1], [0, 0, 1, 1], [], []>} : vector<8x4xf32>, vector<4x256xf32>, vector<8x256xf32> -> vector<8x256xf32>
    %81 = arith.addf %72, %80 : vector<8x256xf32>
    %c241_i32 = arith.constant 241 : i32
    %82 = tpu.dynamic_rotate %31 by %c241_i32 dim 1 : vector<4x256xf32>, i32 -> vector<4x256xf32>
    %cst_42 = arith.constant 0.000000e+00 : f32
    %83 = vector.shape_cast %22 : vector<1x256xi1> to vector<1x256xi1>
    %84 = vector.broadcast %83 : vector<1x256xi1> to vector<4x256xi1>
    %85 = vector.broadcast %cst_42 : f32 to vector<4x256xf32>
    %86 = arith.select %84, %82, %85 : vector<4x256xi1>, vector<4x256xf32>
    %c6 = arith.constant 6 : index
    %c0_43 = arith.constant 0 : index
    %c0_44 = arith.constant 0 : index
    %87 = vector.load %arg2[%c6, %c0_43, %c0_44] : memref<9x8x4xf32, #tpu.memory_space<vmem>>, vector<1x8x4xf32>
    %88 = vector.shape_cast %87 : vector<1x8x4xf32> to vector<8x4xf32>
    %cst_45 = arith.constant dense<0.000000e+00> : vector<8x256xf32>
    %89 = tpu.matmul %88, %86, %cst_45 {dimension_numbers = #tpu.dot_dimension_numbers<[1], [0], [0], [1], [0, 0, 1, 1], [], []>} : vector<8x4xf32>, vector<4x256xf32>, vector<8x256xf32> -> vector<8x256xf32>
    %90 = arith.addf %81, %89 : vector<8x256xf32>
    %c240_i32 = arith.constant 240 : i32
    %91 = tpu.dynamic_rotate %31 by %c240_i32 dim 1 : vector<4x256xf32>, i32 -> vector<4x256xf32>
    %cst_46 = arith.constant 0.000000e+00 : f32
    %92 = vector.shape_cast %24 : vector<1x256xi1> to vector<1x256xi1>
    %93 = vector.broadcast %92 : vector<1x256xi1> to vector<4x256xi1>
    %94 = vector.broadcast %cst_46 : f32 to vector<4x256xf32>
    %95 = arith.select %93, %91, %94 : vector<4x256xi1>, vector<4x256xf32>
    %c7 = arith.constant 7 : index
    %c0_47 = arith.constant 0 : index
    %c0_48 = arith.constant 0 : index
    %96 = vector.load %arg2[%c7, %c0_47, %c0_48] : memref<9x8x4xf32, #tpu.memory_space<vmem>>, vector<1x8x4xf32>
    %97 = vector.shape_cast %96 : vector<1x8x4xf32> to vector<8x4xf32>
    %cst_49 = arith.constant dense<0.000000e+00> : vector<8x256xf32>
    %98 = tpu.matmul %97, %95, %cst_49 {dimension_numbers = #tpu.dot_dimension_numbers<[1], [0], [0], [1], [0, 0, 1, 1], [], []>} : vector<8x4xf32>, vector<4x256xf32>, vector<8x256xf32> -> vector<8x256xf32>
    %99 = arith.addf %90, %98 : vector<8x256xf32>
    %c239_i32 = arith.constant 239 : i32
    %100 = tpu.dynamic_rotate %31 by %c239_i32 dim 1 : vector<4x256xf32>, i32 -> vector<4x256xf32>
    %cst_50 = arith.constant 0.000000e+00 : f32
    %101 = vector.shape_cast %29 : vector<1x256xi1> to vector<1x256xi1>
    %102 = vector.broadcast %101 : vector<1x256xi1> to vector<4x256xi1>
    %103 = vector.broadcast %cst_50 : f32 to vector<4x256xf32>
    %104 = arith.select %102, %100, %103 : vector<4x256xi1>, vector<4x256xf32>
    %c8 = arith.constant 8 : index
    %c0_51 = arith.constant 0 : index
    %c0_52 = arith.constant 0 : index
    %105 = vector.load %arg2[%c8, %c0_51, %c0_52] : memref<9x8x4xf32, #tpu.memory_space<vmem>>, vector<1x8x4xf32>
    %106 = vector.shape_cast %105 : vector<1x8x4xf32> to vector<8x4xf32>
    %cst_53 = arith.constant dense<0.000000e+00> : vector<8x256xf32>
    %107 = tpu.matmul %106, %104, %cst_53 {dimension_numbers = #tpu.dot_dimension_numbers<[1], [0], [0], [1], [0, 0, 1, 1], [], []>} : vector<8x4xf32>, vector<4x256xf32>, vector<8x256xf32> -> vector<8x256xf32>
    %108 = arith.addf %99, %107 : vector<8x256xf32>
    %cst_54 = arith.constant dense<0.000000e+00> : vector<8xf32>
    %109 = vector.multi_reduction <add>, %108, %cst_54 [1] : vector<8x256xf32> to vector<8xf32>
    %110 = vector.shape_cast %109 : vector<8xf32> to vector<8x1xf32>
    %cst_55 = arith.constant 3.906250e-03 : f32
    %111 = vector.broadcast %cst_55 : f32 to vector<8x1xf32>
    %112 = arith.mulf %110, %111 : vector<8x1xf32>
    %113 = vector.broadcast %112 : vector<8x1xf32> to vector<8x256xf32>
    %114 = arith.subf %108, %113 : vector<8x256xf32>
    %115 = arith.mulf %114, %114 : vector<8x256xf32>
    %cst_56 = arith.constant dense<0.000000e+00> : vector<8xf32>
    %116 = vector.multi_reduction <add>, %115, %cst_56 [1] : vector<8x256xf32> to vector<8xf32>
    %117 = vector.shape_cast %116 : vector<8xf32> to vector<8x1xf32>
    %118 = tpu.concatenate %110, %117 in 1 : vector<8x1xf32>, vector<8x1xf32> -> vector<8x2xf32>
    %c0_57 = arith.constant 0 : index
    %c0_58 = arith.constant 0 : index
    %c0_59 = arith.constant 0 : index
    %119 = vector.load %arg5[%c0_57, %c0_58, %c0_59] : memref<2x8x2xf32, #tpu.memory_space<vmem>>, vector<1x8x2xf32>
    %120 = vector.shape_cast %119 : vector<1x8x2xf32> to vector<8x2xf32>
    %121 = vector.shape_cast %118 : vector<8x2xf32> to vector<1x8x2xf32>
    tpu.vector_store %arg5[%c0_57, %c0_58, %c0_59], %121 {strides = array<i32>} : memref<2x8x2xf32, #tpu.memory_space<vmem>>, vector<1x8x2xf32>,
    %c1_60 = arith.constant 1 : index
    %c0_61 = arith.constant 0 : index
    %c0_62 = arith.constant 0 : index
    %122 = vector.load %arg1[%c1_60, %c0_61, %c0_62] : memref<2x4x256xf32, #tpu.memory_space<vmem>>, vector<1x4x256xf32>
    %123 = vector.shape_cast %122 : vector<1x4x256xf32> to vector<4x256xf32>
    %cst_63 = arith.constant 0.000000e+00 : f32
    %124 = vector.broadcast %cst_63 : f32 to vector<8x256xf32>
    %c17_i32_64 = arith.constant 17 : i32
    %125 = tpu.dynamic_rotate %123 by %c17_i32_64 dim 1 : vector<4x256xf32>, i32 -> vector<4x256xf32>
    %cst_65 = arith.constant 0.000000e+00 : f32
    %126 = vector.shape_cast %6 : vector<1x256xi1> to vector<1x256xi1>
    %127 = vector.broadcast %126 : vector<1x256xi1> to vector<4x256xi1>
    %128 = vector.broadcast %cst_65 : f32 to vector<4x256xf32>
    %129 = arith.select %127, %125, %128 : vector<4x256xi1>, vector<4x256xf32>
    %c0_66 = arith.constant 0 : index
    %c0_67 = arith.constant 0 : index
    %c0_68 = arith.constant 0 : index
    %130 = vector.load %arg2[%c0_66, %c0_67, %c0_68] : memref<9x8x4xf32, #tpu.memory_space<vmem>>, vector<1x8x4xf32>
    %131 = vector.shape_cast %130 : vector<1x8x4xf32> to vector<8x4xf32>
    %cst_69 = arith.constant dense<0.000000e+00> : vector<8x256xf32>
    %132 = tpu.matmul %131, %129, %cst_69 {dimension_numbers = #tpu.dot_dimension_numbers<[1], [0], [0], [1], [0, 0, 1, 1], [], []>} : vector<8x4xf32>, vector<4x256xf32>, vector<8x256xf32> -> vector<8x256xf32>
    %133 = arith.addf %124, %132 : vector<8x256xf32>
    %c16_i32_70 = arith.constant 16 : i32
    %134 = tpu.dynamic_rotate %123 by %c16_i32_70 dim 1 : vector<4x256xf32>, i32 -> vector<4x256xf32>
    %cst_71 = arith.constant 0.000000e+00 : f32
    %135 = vector.shape_cast %8 : vector<1x256xi1> to vector<1x256xi1>
    %136 = vector.broadcast %135 : vector<1x256xi1> to vector<4x256xi1>
    %137 = vector.broadcast %cst_71 : f32 to vector<4x256xf32>
    %138 = arith.select %136, %134, %137 : vector<4x256xi1>, vector<4x256xf32>
    %c1_72 = arith.constant 1 : index
    %c0_73 = arith.constant 0 : index
    %c0_74 = arith.constant 0 : index
    %139 = vector.load %arg2[%c1_72, %c0_73, %c0_74] : memref<9x8x4xf32, #tpu.memory_space<vmem>>, vector<1x8x4xf32>
    %140 = vector.shape_cast %139 : vector<1x8x4xf32> to vector<8x4xf32>
    %cst_75 = arith.constant dense<0.000000e+00> : vector<8x256xf32>
    %141 = tpu.matmul %140, %138, %cst_75 {dimension_numbers = #tpu.dot_dimension_numbers<[1], [0], [0], [1], [0, 0, 1, 1], [], []>} : vector<8x4xf32>, vector<4x256xf32>, vector<8x256xf32> -> vector<8x256xf32>
    %142 = arith.addf %133, %141 : vector<8x256xf32>
    %c15_i32_76 = arith.constant 15 : i32
    %143 = tpu.dynamic_rotate %123 by %c15_i32_76 dim 1 : vector<4x256xf32>, i32 -> vector<4x256xf32>
    %cst_77 = arith.constant 0.000000e+00 : f32
    %144 = vector.shape_cast %13 : vector<1x256xi1> to vector<1x256xi1>
    %145 = vector.broadcast %144 : vector<1x256xi1> to vector<4x256xi1>
    %146 = vector.broadcast %cst_77 : f32 to vector<4x256xf32>
    %147 = arith.select %145, %143, %146 : vector<4x256xi1>, vector<4x256xf32>
    %c2_78 = arith.constant 2 : index
    %c0_79 = arith.constant 0 : index
    %c0_80 = arith.constant 0 : index
    %148 = vector.load %arg2[%c2_78, %c0_79, %c0_80] : memref<9x8x4xf32, #tpu.memory_space<vmem>>, vector<1x8x4xf32>
    %149 = vector.shape_cast %148 : vector<1x8x4xf32> to vector<8x4xf32>
    %cst_81 = arith.constant dense<0.000000e+00> : vector<8x256xf32>
    %150 = tpu.matmul %149, %147, %cst_81 {dimension_numbers = #tpu.dot_dimension_numbers<[1], [0], [0], [1], [0, 0, 1, 1], [], []>} : vector<8x4xf32>, vector<4x256xf32>, vector<8x256xf32> -> vector<8x256xf32>
    %151 = arith.addf %142, %150 : vector<8x256xf32>
    %c1_i32_82 = arith.constant 1 : i32
    %152 = tpu.dynamic_rotate %123 by %c1_i32_82 dim 1 : vector<4x256xf32>, i32 -> vector<4x256xf32>
    %cst_83 = arith.constant 0.000000e+00 : f32
    %153 = vector.shape_cast %15 : vector<1x256xi1> to vector<1x256xi1>
    %154 = vector.broadcast %153 : vector<1x256xi1> to vector<4x256xi1>
    %155 = vector.broadcast %cst_83 : f32 to vector<4x256xf32>
    %156 = arith.select %154, %152, %155 : vector<4x256xi1>, vector<4x256xf32>
    %c3_84 = arith.constant 3 : index
    %c0_85 = arith.constant 0 : index
    %c0_86 = arith.constant 0 : index
    %157 = vector.load %arg2[%c3_84, %c0_85, %c0_86] : memref<9x8x4xf32, #tpu.memory_space<vmem>>, vector<1x8x4xf32>
    %158 = vector.shape_cast %157 : vector<1x8x4xf32> to vector<8x4xf32>
    %cst_87 = arith.constant dense<0.000000e+00> : vector<8x256xf32>
    %159 = tpu.matmul %158, %156, %cst_87 {dimension_numbers = #tpu.dot_dimension_numbers<[1], [0], [0], [1], [0, 0, 1, 1], [], []>} : vector<8x4xf32>, vector<4x256xf32>, vector<8x256xf32> -> vector<8x256xf32>
    %160 = arith.addf %151, %159 : vector<8x256xf32>
    %c4_88 = arith.constant 4 : index
    %c0_89 = arith.constant 0 : index
    %c0_90 = arith.constant 0 : index
    %161 = vector.load %arg2[%c4_88, %c0_89, %c0_90] : memref<9x8x4xf32, #tpu.memory_space<vmem>>, vector<1x8x4xf32>
    %162 = vector.shape_cast %161 : vector<1x8x4xf32> to vector<8x4xf32>
    %cst_91 = arith.constant dense<0.000000e+00> : vector<8x256xf32>
    %163 = tpu.matmul %162, %123, %cst_91 {dimension_numbers = #tpu.dot_dimension_numbers<[1], [0], [0], [1], [0, 0, 1, 1], [], []>} : vector<8x4xf32>, vector<4x256xf32>, vector<8x256xf32> -> vector<8x256xf32>
    %164 = arith.addf %160, %163 : vector<8x256xf32>
    %c255_i32_92 = arith.constant 255 : i32
    %165 = tpu.dynamic_rotate %123 by %c255_i32_92 dim 1 : vector<4x256xf32>, i32 -> vector<4x256xf32>
    %cst_93 = arith.constant 0.000000e+00 : f32
    %166 = vector.shape_cast %17 : vector<1x256xi1> to vector<1x256xi1>
    %167 = vector.broadcast %166 : vector<1x256xi1> to vector<4x256xi1>
    %168 = vector.broadcast %cst_93 : f32 to vector<4x256xf32>
    %169 = arith.select %167, %165, %168 : vector<4x256xi1>, vector<4x256xf32>
    %c5_94 = arith.constant 5 : index
    %c0_95 = arith.constant 0 : index
    %c0_96 = arith.constant 0 : index
    %170 = vector.load %arg2[%c5_94, %c0_95, %c0_96] : memref<9x8x4xf32, #tpu.memory_space<vmem>>, vector<1x8x4xf32>
    %171 = vector.shape_cast %170 : vector<1x8x4xf32> to vector<8x4xf32>
    %cst_97 = arith.constant dense<0.000000e+00> : vector<8x256xf32>
    %172 = tpu.matmul %171, %169, %cst_97 {dimension_numbers = #tpu.dot_dimension_numbers<[1], [0], [0], [1], [0, 0, 1, 1], [], []>} : vector<8x4xf32>, vector<4x256xf32>, vector<8x256xf32> -> vector<8x256xf32>
    %173 = arith.addf %164, %172 : vector<8x256xf32>
    %c241_i32_98 = arith.constant 241 : i32
    %174 = tpu.dynamic_rotate %123 by %c241_i32_98 dim 1 : vector<4x256xf32>, i32 -> vector<4x256xf32>
    %cst_99 = arith.constant 0.000000e+00 : f32
    %175 = vector.shape_cast %22 : vector<1x256xi1> to vector<1x256xi1>
    %176 = vector.broadcast %175 : vector<1x256xi1> to vector<4x256xi1>
    %177 = vector.broadcast %cst_99 : f32 to vector<4x256xf32>
    %178 = arith.select %176, %174, %177 : vector<4x256xi1>, vector<4x256xf32>
    %c6_100 = arith.constant 6 : index
    %c0_101 = arith.constant 0 : index
    %c0_102 = arith.constant 0 : index
    %179 = vector.load %arg2[%c6_100, %c0_101, %c0_102] : memref<9x8x4xf32, #tpu.memory_space<vmem>>, vector<1x8x4xf32>
    %180 = vector.shape_cast %179 : vector<1x8x4xf32> to vector<8x4xf32>
    %cst_103 = arith.constant dense<0.000000e+00> : vector<8x256xf32>
    %181 = tpu.matmul %180, %178, %cst_103 {dimension_numbers = #tpu.dot_dimension_numbers<[1], [0], [0], [1], [0, 0, 1, 1], [], []>} : vector<8x4xf32>, vector<4x256xf32>, vector<8x256xf32> -> vector<8x256xf32>
    %182 = arith.addf %173, %181 : vector<8x256xf32>
    %c240_i32_104 = arith.constant 240 : i32
    %183 = tpu.dynamic_rotate %123 by %c240_i32_104 dim 1 : vector<4x256xf32>, i32 -> vector<4x256xf32>
    %cst_105 = arith.constant 0.000000e+00 : f32
    %184 = vector.shape_cast %24 : vector<1x256xi1> to vector<1x256xi1>
    %185 = vector.broadcast %184 : vector<1x256xi1> to vector<4x256xi1>
    %186 = vector.broadcast %cst_105 : f32 to vector<4x256xf32>
    %187 = arith.select %185, %183, %186 : vector<4x256xi1>, vector<4x256xf32>
    %c7_106 = arith.constant 7 : index
    %c0_107 = arith.constant 0 : index
    %c0_108 = arith.constant 0 : index
    %188 = vector.load %arg2[%c7_106, %c0_107, %c0_108] : memref<9x8x4xf32, #tpu.memory_space<vmem>>, vector<1x8x4xf32>
    %189 = vector.shape_cast %188 : vector<1x8x4xf32> to vector<8x4xf32>
    %cst_109 = arith.constant dense<0.000000e+00> : vector<8x256xf32>
    %190 = tpu.matmul %189, %187, %cst_109 {dimension_numbers = #tpu.dot_dimension_numbers<[1], [0], [0], [1], [0, 0, 1, 1], [], []>} : vector<8x4xf32>, vector<4x256xf32>, vector<8x256xf32> -> vector<8x256xf32>
    %191 = arith.addf %182, %190 : vector<8x256xf32>
    %c239_i32_110 = arith.constant 239 : i32
    %192 = tpu.dynamic_rotate %123 by %c239_i32_110 dim 1 : vector<4x256xf32>, i32 -> vector<4x256xf32>
    %cst_111 = arith.constant 0.000000e+00 : f32
    %193 = vector.shape_cast %29 : vector<1x256xi1> to vector<1x256xi1>
    %194 = vector.broadcast %193 : vector<1x256xi1> to vector<4x256xi1>
    %195 = vector.broadcast %cst_111 : f32 to vector<4x256xf32>
    %196 = arith.select %194, %192, %195 : vector<4x256xi1>, vector<4x256xf32>
    %c8_112 = arith.constant 8 : index
    %c0_113 = arith.constant 0 : index
    %c0_114 = arith.constant 0 : index
    %197 = vector.load %arg2[%c8_112, %c0_113, %c0_114] : memref<9x8x4xf32, #tpu.memory_space<vmem>>, vector<1x8x4xf32>
    %198 = vector.shape_cast %197 : vector<1x8x4xf32> to vector<8x4xf32>
    %cst_115 = arith.constant dense<0.000000e+00> : vector<8x256xf32>
    %199 = tpu.matmul %198, %196, %cst_115 {dimension_numbers = #tpu.dot_dimension_numbers<[1], [0], [0], [1], [0, 0, 1, 1], [], []>} : vector<8x4xf32>, vector<4x256xf32>, vector<8x256xf32> -> vector<8x256xf32>
    %200 = arith.addf %191, %199 : vector<8x256xf32>
    %cst_116 = arith.constant dense<0.000000e+00> : vector<8xf32>
    %201 = vector.multi_reduction <add>, %200, %cst_116 [1] : vector<8x256xf32> to vector<8xf32>
    %202 = vector.shape_cast %201 : vector<8xf32> to vector<8x1xf32>
    %cst_117 = arith.constant 3.906250e-03 : f32
    %203 = vector.broadcast %cst_117 : f32 to vector<8x1xf32>
    %204 = arith.mulf %202, %203 : vector<8x1xf32>
    %205 = vector.broadcast %204 : vector<8x1xf32> to vector<8x256xf32>
    %206 = arith.subf %200, %205 : vector<8x256xf32>
    %207 = arith.mulf %206, %206 : vector<8x256xf32>
    %cst_118 = arith.constant dense<0.000000e+00> : vector<8xf32>
    %208 = vector.multi_reduction <add>, %207, %cst_118 [1] : vector<8x256xf32> to vector<8xf32>
    %209 = vector.shape_cast %208 : vector<8xf32> to vector<8x1xf32>
    %210 = tpu.concatenate %202, %209 in 1 : vector<8x1xf32>, vector<8x1xf32> -> vector<8x2xf32>
    %c1_119 = arith.constant 1 : index
    %c0_120 = arith.constant 0 : index
    %c0_121 = arith.constant 0 : index
    %211 = vector.load %arg5[%c1_119, %c0_120, %c0_121] : memref<2x8x2xf32, #tpu.memory_space<vmem>>, vector<1x8x2xf32>
    %212 = vector.shape_cast %211 : vector<1x8x2xf32> to vector<8x2xf32>
    %213 = vector.shape_cast %210 : vector<8x2xf32> to vector<1x8x2xf32>
    tpu.vector_store %arg5[%c1_119, %c0_120, %c0_121], %213 {strides = array<i32>} : memref<2x8x2xf32, #tpu.memory_space<vmem>>, vector<1x8x2xf32>,
    return
  }
  func.func @transform_0(%arg0: i32) -> (i32, i32, i32) {
    %c0_i32 = arith.constant 0 : i32
    %c0_i32_0 = arith.constant 0 : i32
    %c0_i32_1 = arith.constant 0 : i32
    return %arg0, %c0_i32, %c0_i32_0 : i32, i32, i32
  }
  func.func @transform_1(%arg0: i32) -> (i32, i32, i32) {
    %c0_i32 = arith.constant 0 : i32
    %c0_i32_0 = arith.constant 0 : i32
    %c0_i32_1 = arith.constant 0 : i32
    %c0_i32_2 = arith.constant 0 : i32
    return %c0_i32, %c0_i32_0, %c0_i32_1 : i32, i32, i32
  }
  func.func @transform_2(%arg0: i32) -> (i32, i32) {
    %c0_i32 = arith.constant 0 : i32
    %c0_i32_0 = arith.constant 0 : i32
    %c0_i32_1 = arith.constant 0 : i32
    return %c0_i32, %c0_i32_0 : i32, i32
  }
  func.func @transform_3(%arg0: i32) -> (i32, i32) {
    %c0_i32 = arith.constant 0 : i32
    %c0_i32_0 = arith.constant 0 : i32
    %c0_i32_1 = arith.constant 0 : i32
    return %c0_i32, %c0_i32_0 : i32, i32
  }
  func.func @transform_4(%arg0: i32) -> (i32, i32, i32) {
    %c0_i32 = arith.constant 0 : i32
    %c0_i32_0 = arith.constant 0 : i32
    %c0_i32_1 = arith.constant 0 : i32
    return %arg0, %c0_i32, %c0_i32_0 : i32, i32, i32
  }
}

</mosaic_0001>

<llo_original>
// kernel: tpu_custom_call.1
$region0: #{tpu_custom_call.1}
  #allocation0 [shape = 'u32[]', space=smem, size = 0x4, offset = 0x4, fixed_abs, tag = 'smem constant byte address 0x4 - core index']
  #allocation1 [shape = 'u32[144,128]{1,0:T(1,128)}', space=vmem, size = 0x12000, scoped, tag = 'internal scratch']
  %s0 = inlined_call_operand.vmem [shape: f32[2,4,256], index: 0, kind: input, shape index: {}]
  %s1 = inlined_call_operand.vmem [shape: f32[9,8,4], index: 1, kind: input, shape index: {}]
  %s2 = inlined_call_operand.vmem [shape: s32[1,256], index: 2, kind: input, shape index: {}]
  %s3 = inlined_call_operand.vmem [shape: s32[1,256], index: 3, kind: input, shape index: {}]
  %s4 = inlined_call_operand.vmem [shape: f32[2,8,2], index: 4, kind: output, shape index: {}]
  %s5 = sld [smem:[#allocation0]]
  $region26: #{tpu_custom_call.1} parent=0
    _
  %s7 = ssub.s32 1, %s5
  %s8 = scalar_select 0, %s7, %s5
  // Predicated region
  $region2: #{tpu_custom_call.1} parent=0 // pred_check
    _
  $region3: #{tpu_custom_call.1} parent=0 // pred_check_branch
    %10 = sbr.rel (0) target = $region5
  $region4: #{tpu_custom_call.1} parent=0 // pred_region
    _
  $region5: #{tpu_custom_call.1} parent=0 // pred_fallthru
    _
  // Predicated region
  $region6: #{tpu_custom_call.1} parent=0 // pred_check
    _
  $region7: #{tpu_custom_call.1} parent=0 // pred_check_branch
    %12 = sbr.rel (0) target = $region9
  $region8: #{tpu_custom_call.1} parent=0 // pred_region
    _
  $region9: #{tpu_custom_call.1} parent=0 // pred_fallthru
    _
  // Predicated region
  $region10: #{tpu_custom_call.1} parent=0 // pred_check
    _
  $region11: #{tpu_custom_call.1} parent=0 // pred_check_branch
    %14 = sbr.rel (0) target = $region13
  $region12: #{tpu_custom_call.1} parent=0 // pred_region
    _
  $region13: #{tpu_custom_call.1} parent=0 // pred_fallthru
    _
  // Predicated region
  $region14: #{tpu_custom_call.1} parent=0 // pred_check
    _
  $region15: #{tpu_custom_call.1} parent=0 // pred_check_branch
    %16 = sbr.rel (0) target = $region17
  $region16: #{tpu_custom_call.1} parent=0 // pred_region
    _
  $region17: #{tpu_custom_call.1} parent=0 // pred_fallthru
    _
  %v17 = vld [vmem:[%s2] sm:$0x3]
  %v18 = vld [vmem:[%s3] sm:$0x3]
  %vm19 = vcmp.ge.s32.totalorder %v17, 1
  %vm20 = vcmp.ge.s32.totalorder %v18, 1
  %vm21 = vmand %vm19, %vm20
  %vm22 = vcmp.lt.s32.totalorder %v18, 15
  %vm23 = vmand %vm19, %vm22
  %vm24 = vcmp.lt.s32.totalorder %v17, 15
  %vm25 = vmand %vm24, %vm20
  %vm26 = vmand %vm24, %vm22
  %v27 = vld [vmem:[%s0] sm:$0xff]
  %v29 = vcombine.high %v27, %v27
  %31 = vrot.lane.b32.xlu0 %v27, 17
  %v32 = vpop.permute.xlu0 %31
  %33 = vrot.lane.b32.xlu0 %v29, 17
  %v34 = vpop.permute.xlu0 %33
  %v35 = vlaneseq
  %v36 = vand.u32 %v35, 127
  %vm37 = vcmp.lt.s32.totalorder %v36, 17
  %v38 = vsel %vm37, %v32, %v34
  %v39 = vsel %vm37, %v34, %v32
  %v40 = vsel %vm21, 1, 0
  %v41 = vlaneseq
  %v42 = vshrl.u32 %v41, 7
  %v43 = vsub.s32 0, %v42
  %v44 = vrot.slane %v40, %v43
  %v45 = vlaneseq
  %v46 = vshrl.u32 %v45, 7
  %v47 = vsub.s32 1, %v46
  %v48 = vrot.slane %v40, %v47
  %vm49 = vcmp.eq.s32.totalorder %v44, 1
  %vm50 = vcmp.eq.s32.totalorder %v48, 1
  %v51 = vsel %vm49, %v39, 0.0
  %v52 = vsel %vm50, %v38, 0.0
  %v53 = vld [vmem:[%s1] sm:$0xff]
  %54 = vrot.lane.b32.xlu0 %v27, 16
  %v55 = vpop.permute.xlu0 %54
  %56 = vrot.lane.b32.xlu0 %v29, 16
  %v57 = vpop.permute.xlu0 %56
  %vm58 = vcmp.lt.s32.totalorder %v36, 16
  %v59 = vsel %vm58, %v55, %v57
  %v60 = vsel %vm58, %v57, %v55
  %v61 = vsel %vm19, 1, 0
  %v62 = vlaneseq
  %v63 = vshrl.u32 %v62, 7
  %v64 = vsub.s32 0, %v63
  %v65 = vrot.slane %v61, %v64
  %v66 = vlaneseq
  %v67 = vshrl.u32 %v66, 7
  %v68 = vsub.s32 1, %v67
  %v69 = vrot.slane %v61, %v68
  %vm70 = vcmp.eq.s32.totalorder %v65, 1
  %vm71 = vcmp.eq.s32.totalorder %v69, 1
  %v72 = vsel %vm70, %v60, 0.0
  %v73 = vsel %vm71, %v59, 0.0
  %s74 = scalar_lea.vmem %s1, 8
  %v75 = vld [vmem:[%s74] sm:$0xff]
  %vm76 = vcmask 31744
  %v78 = vsel %vm76, %v75, 0
  %vm80 = vcmask 1043456
  %v82 = vsel %vm80, %v72, 0
  %v85 = vsel %vm80, %v73, 0
  %87 = vmatprep.subr.mxu0 0.0
  %88 = vmatpush1.msra.mxu0 0.0
  %89 = vmatprep.subr.mxu0 0.0
  %90 = vmatpush1.msra.mxu0 0.0
  %91 = vmatprep.subr.mxu0 0.0
  %92 = vmatpush1.msra.mxu0 0.0
  %93 = vmatprep.subr.mxu0 0.0
  %94 = vmatpush1.msra.mxu0 0.0
  %95 = vmatprep.subr.mxu0 0.0
  %96 = vmatpush1.msra.mxu0 0.0
  %97 = vmatprep.subr.mxu0 0.0
  %98 = vmatpush1.msra.mxu0 0.0
  %99 = vmatprep.subr.mxu0 0.0
  %100 = vmatpush1.msra.mxu0 0.0
  %101 = vmatprep.subr.mxu0 0.0
  %102 = vmatpush1.msra.mxu0 0.0
  %103 = vmatprep.subr.mxu0 0.0
  %104 = vmatpush1.msra.mxu0 0.0
  %105 = vmatprep.subr.mxu0 0.0
  %106 = vmatpush1.msra.mxu0 0.0
  %107 = vmatprep.subr.mxu0 0.0
  %108 = vmatpush1.msra.mxu0 0.0
  %109 = vmatprep.subr.mxu0 0.0
  %110 = vmatpush1.msra.mxu0 0.0
  %111 = vmatprep.subr.mxu0 0.0
  %112 = vmatpush1.msra.mxu0 0.0
  %113 = vmatprep.subr.mxu0 0.0
  %114 = vmatpush1.msra.mxu0 0.0
  %115 = vmatprep.subr.mxu0 0.0
  %116 = vmatpush1.msra.mxu0 0.0
  %117 = vmatprep.subr.mxu0 %v85
  %118 = vmatpush1.msra.mxu0 %v82
  %119 = vmatprep.subr.mxu0 0.0
  %120 = vmatpush2.msra.mxu0 0.0
  %121 = vmatprep.subr.mxu0 0.0
  %122 = vmatpush2.msra.mxu0 0.0
  %123 = vmatprep.subr.mxu0 0.0
  %124 = vmatpush2.msra.mxu0 0.0
  %125 = vmatprep.subr.mxu0 0.0
  %126 = vmatpush2.msra.mxu0 0.0
  %127 = vmatprep.subr.mxu0 0.0
  %128 = vmatpush2.msra.mxu0 0.0
  %129 = vmatprep.subr.mxu0 0.0
  %130 = vmatpush2.msra.mxu0 0.0
  %131 = vmatprep.subr.mxu0 0.0
  %132 = vmatpush2.msra.mxu0 0.0
  %133 = vmatprep.subr.mxu0 0.0
  %134 = vmatpush2.msra.mxu0 0.0
  %135 = vmatprep.subr.mxu0 0.0
  %136 = vmatpush2.msra.mxu0 0.0
  %137 = vmatprep.subr.mxu0 0.0
  %138 = vmatpush2.msra.mxu0 0.0
  %139 = vmatprep.subr.mxu0 0.0
  %140 = vmatpush2.msra.mxu0 0.0
  %141 = vmatprep.subr.mxu0 0.0
  %142 = vmatpush2.msra.mxu0 0.0
  %143 = vmatprep.subr.mxu0 0.0
  %144 = vmatpush2.msra.mxu0 0.0
  %145 = vmatprep.subr.mxu0 0.0
  %146 = vmatpush2.msra.mxu0 0.0
  %147 = vmatprep.subr.mxu0 0.0
  %148 = vmatpush2.msra.mxu0 0.0
  %149 = vmatprep.subr.mxu0 0.0
  %150 = vmatpush2.msra.mxu0 0.0
  %151 = vmatprep.mubr.f32.mxu0 0.0
  %152 = vmatmul.mubr.f32.gmra.mxu0 %v78
  %v153 = vpop.f32.mrf.mxu0
  %v154 = vadd.f32 0.0, %v153
  %v155 = vpop.f32.mrf.mxu0
  %v156 = vadd.f32 0.0, %v155
  %157 = vdwg.mxu0
  %v159 = vsel %vm76, %v53, 0
  %v162 = vsel %vm80, %v51, 0
  %v165 = vsel %vm80, %v52, 0
  %167 = vmatprep.subr.mxu0 0.0
  %168 = vmatpush1.msra.mxu0 0.0
  %169 = vmatprep.subr.mxu0 0.0
  %170 = vmatpush1.msra.mxu0 0.0
  %171 = vmatprep.subr.mxu0 0.0
  %172 = vmatpush1.msra.mxu0 0.0
  %173 = vmatprep.subr.mxu0 0.0
  %174 = vmatpush1.msra.mxu0 0.0
  %175 = vmatprep.subr.mxu0 0.0
  %176 = vmatpush1.msra.mxu0 0.0
  %177 = vmatprep.subr.mxu0 0.0
  %178 = vmatpush1.msra.mxu0 0.0
  %179 = vmatprep.subr.mxu0 0.0
  %180 = vmatpush1.msra.mxu0 0.0
  %181 = vmatprep.subr.mxu0 0.0
  %182 = vmatpush1.msra.mxu0 0.0
  %183 = vmatprep.subr.mxu0 0.0
  %184 = vmatpush1.msra.mxu0 0.0
  %185 = vmatprep.subr.mxu0 0.0
  %186 = vmatpush1.msra.mxu0 0.0
  %187 = vmatprep.subr.mxu0 0.0
  %188 = vmatpush1.msra.mxu0 0.0
  %189 = vmatprep.subr.mxu0 0.0
  %190 = vmatpush1.msra.mxu0 0.0
  %191 = vmatprep.subr.mxu0 0.0
  %192 = vmatpush1.msra.mxu0 0.0
  %193 = vmatprep.subr.mxu0 0.0
  %194 = vmatpush1.msra.mxu0 0.0
  %195 = vmatprep.subr.mxu0 0.0
  %196 = vmatpush1.msra.mxu0 0.0
  %197 = vmatprep.subr.mxu0 %v165
  %198 = vmatpush1.msra.mxu0 %v162
  %199 = vmatprep.subr.mxu0 0.0
  %200 = vmatpush2.msra.mxu0 0.0
  %201 = vmatprep.subr.mxu0 0.0
  %202 = vmatpush2.msra.mxu0 0.0
  %203 = vmatprep.subr.mxu0 0.0
  %204 = vmatpush2.msra.mxu0 0.0
  %205 = vmatprep.subr.mxu0 0.0
  %206 = vmatpush2.msra.mxu0 0.0
  %207 = vmatprep.subr.mxu0 0.0
  %208 = vmatpush2.msra.mxu0 0.0
  %209 = vmatprep.subr.mxu0 0.0
  %210 = vmatpush2.msra.mxu0 0.0
  %211 = vmatprep.subr.mxu0 0.0
  %212 = vmatpush2.msra.mxu0 0.0
  %213 = vmatprep.subr.mxu0 0.0
  %214 = vmatpush2.msra.mxu0 0.0
  %215 = vmatprep.subr.mxu0 0.0
  %216 = vmatpush2.msra.mxu0 0.0
  %217 = vmatprep.subr.mxu0 0.0
  %218 = vmatpush2.msra.mxu0 0.0
  %219 = vmatprep.subr.mxu0 0.0
  %220 = vmatpush2.msra.mxu0 0.0
  %221 = vmatprep.subr.mxu0 0.0
  %222 = vmatpush2.msra.mxu0 0.0
  %223 = vmatprep.subr.mxu0 0.0
  %224 = vmatpush2.msra.mxu0 0.0
  %225 = vmatprep.subr.mxu0 0.0
  %226 = vmatpush2.msra.mxu0 0.0
  %227 = vmatprep.subr.mxu0 0.0
  %228 = vmatpush2.msra.mxu0 0.0
  %229 = vmatprep.subr.mxu0 0.0
  %230 = vmatpush2.msra.mxu0 0.0
  %231 = vmatprep.mubr.f32.mxu0 0.0
  %232 = vmatmul.mubr.f32.gmra.mxu0 %v159
  %v233 = vpop.f32.mrf.mxu0
  %v234 = vadd.f32 %v154, %v233
  %v235 = vpop.f32.mrf.mxu0
  %v236 = vadd.f32 %v156, %v235
  %237 = vdwg.mxu0
  %238 = vrot.lane.b32.xlu0 %v27, 15
  %v239 = vpop.permute.xlu0 %238
  %240 = vrot.lane.b32.xlu0 %v29, 15
  %v241 = vpop.permute.xlu0 %240
  %vm242 = vcmp.lt.s32.totalorder %v36, 15
  %v243 = vsel %vm242, %v239, %v241
  %v244 = vsel %vm242, %v241, %v239
  %v245 = vsel %vm23, 1, 0
  %v246 = vlaneseq
  %v247 = vshrl.u32 %v246, 7
  %v248 = vsub.s32 0, %v247
  %v249 = vrot.slane %v245, %v248
  %v250 = vlaneseq
  %v251 = vshrl.u32 %v250, 7
  %v252 = vsub.s32 1, %v251
  %v253 = vrot.slane %v245, %v252
  %vm254 = vcmp.eq.s32.totalorder %v249, 1
  %vm255 = vcmp.eq.s32.totalorder %v253, 1
  %v256 = vsel %vm254, %v244, 0.0
  %v257 = vsel %vm255, %v243, 0.0
  %s258 = scalar_lea.vmem %s1, 16
  %v259 = vld [vmem:[%s258] sm:$0xff]
  %v261 = vsel %vm76, %v259, 0
  %v264 = vsel %vm80, %v256, 0
  %v267 = vsel %vm80, %v257, 0
  %269 = vmatprep.subr.mxu0 0.0
  %270 = vmatpush1.msra.mxu0 0.0
  %271 = vmatprep.subr.mxu0 0.0
  %272 = vmatpush1.msra.mxu0 0.0
  %273 = vmatprep.subr.mxu0 0.0
  %274 = vmatpush1.msra.mxu0 0.0
  %275 = vmatprep.subr.mxu0 0.0
  %276 = vmatpush1.msra.mxu0 0.0
  %277 = vmatprep.subr.mxu0 0.0
  %278 = vmatpush1.msra.mxu0 0.0
  %279 = vmatprep.subr.mxu0 0.0
  %280 = vmatpush1.msra.mxu0 0.0
  %281 = vmatprep.subr.mxu0 0.0
  %282 = vmatpush1.msra.mxu0 0.0
  %283 = vmatprep.subr.mxu0 0.0
  %284 = vmatpush1.msra.mxu0 0.0
  %285 = vmatprep.subr.mxu0 0.0
  %286 = vmatpush1.msra.mxu0 0.0
  %287 = vmatprep.subr.mxu0 0.0
  %288 = vmatpush1.msra.mxu0 0.0
  %289 = vmatprep.subr.mxu0 0.0
  %290 = vmatpush1.msra.mxu0 0.0
  %291 = vmatprep.subr.mxu0 0.0
  %292 = vmatpush1.msra.mxu0 0.0
  %293 = vmatprep.subr.mxu0 0.0
  %294 = vmatpush1.msra.mxu0 0.0
  %295 = vmatprep.subr.mxu0 0.0
  %296 = vmatpush1.msra.mxu0 0.0
  %297 = vmatprep.subr.mxu0 0.0
  %298 = vmatpush1.msra.mxu0 0.0
  %299 = vmatprep.subr.mxu0 %v267
  %300 = vmatpush1.msra.mxu0 %v264
  %301 = vmatprep.subr.mxu0 0.0
  %302 = vmatpush2.msra.mxu0 0.0
  %303 = vmatprep.subr.mxu0 0.0
  %304 = vmatpush2.msra.mxu0 0.0
  %305 = vmatprep.subr.mxu0 0.0
  %306 = vmatpush2.msra.mxu0 0.0
  %307 = vmatprep.subr.mxu0 0.0
  %308 = vmatpush2.msra.mxu0 0.0
  %309 = vmatprep.subr.mxu0 0.0
  %310 = vmatpush2.msra.mxu0 0.0
  %311 = vmatprep.subr.mxu0 0.0
  %312 = vmatpush2.msra.mxu0 0.0
  %313 = vmatprep.subr.mxu0 0.0
  %314 = vmatpush2.msra.mxu0 0.0
  %315 = vmatprep.subr.mxu0 0.0
  %316 = vmatpush2.msra.mxu0 0.0
  %317 = vmatprep.subr.mxu0 0.0
  %318 = vmatpush2.msra.mxu0 0.0
  %319 = vmatprep.subr.mxu0 0.0
  %320 = vmatpush2.msra.mxu0 0.0
  %321 = vmatprep.subr.mxu0 0.0
  %322 = vmatpush2.msra.mxu0 0.0
  %323 = vmatprep.subr.mxu0 0.0
  %324 = vmatpush2.msra.mxu0 0.0
  %325 = vmatprep.subr.mxu0 0.0
  %326 = vmatpush2.msra.mxu0 0.0
  %327 = vmatprep.subr.mxu0 0.0
  %328 = vmatpush2.msra.mxu0 0.0
  %329 = vmatprep.subr.mxu0 0.0
  %330 = vmatpush2.msra.mxu0 0.0
  %331 = vmatprep.subr.mxu0 0.0
  %332 = vmatpush2.msra.mxu0 0.0
  %333 = vmatprep.mubr.f32.mxu0 0.0
  %334 = vmatmul.mubr.f32.gmra.mxu0 %v261
  %v335 = vpop.f32.mrf.mxu0
  %v336 = vadd.f32 0.0, %v335
  %v337 = vpop.f32.mrf.mxu0
  %v338 = vadd.f32 0.0, %v337
  %339 = vdwg.mxu0
  %v340 = vadd.f32 %v234, %v336
  %v341 = vadd.f32 %v236, %v338
  %342 = vrot.lane.b32.xlu0 %v27, 1
  %v343 = vpop.permute.xlu0 %342
  %344 = vrot.lane.b32.xlu0 %v29, 1
  %v345 = vpop.permute.xlu0 %344
  %vm346 = vcmp.lt.s32.totalorder %v36, 1
  %v347 = vsel %vm346, %v343, %v345
  %v348 = vsel %vm346, %v345, %v343
  %v349 = vsel %vm20, 1, 0
  %v350 = vlaneseq
  %v351 = vshrl.u32 %v350, 7
  %v352 = vsub.s32 0, %v351
  %v353 = vrot.slane %v349, %v352
  %v354 = vlaneseq
  %v355 = vshrl.u32 %v354, 7
  %v356 = vsub.s32 1, %v355
  %v357 = vrot.slane %v349, %v356
  %vm358 = vcmp.eq.s32.totalorder %v353, 1
  %vm359 = vcmp.eq.s32.totalorder %v357, 1
  %v360 = vsel %vm358, %v348, 0.0
  %v361 = vsel %vm359, %v347, 0.0
  %s362 = scalar_lea.vmem %s1, 24
  %v363 = vld [vmem:[%s362] sm:$0xff]
  %v365 = vsel %vm76, %v363, 0
  %v368 = vsel %vm80, %v360, 0
  %v371 = vsel %vm80, %v361, 0
  %373 = vmatprep.subr.mxu0 0.0
  %374 = vmatpush1.msra.mxu0 0.0
  %375 = vmatprep.subr.mxu0 0.0
  %376 = vmatpush1.msra.mxu0 0.0
  %377 = vmatprep.subr.mxu0 0.0
  %378 = vmatpush1.msra.mxu0 0.0
  %379 = vmatprep.subr.mxu0 0.0
  %380 = vmatpush1.msra.mxu0 0.0
  %381 = vmatprep.subr.mxu0 0.0
  %382 = vmatpush1.msra.mxu0 0.0
  %383 = vmatprep.subr.mxu0 0.0
  %384 = vmatpush1.msra.mxu0 0.0
  %385 = vmatprep.subr.mxu0 0.0
  %386 = vmatpush1.msra.mxu0 0.0
  %387 = vmatprep.subr.mxu0 0.0
  %388 = vmatpush1.msra.mxu0 0.0
  %389 = vmatprep.subr.mxu0 0.0
  %390 = vmatpush1.msra.mxu0 0.0
  %391 = vmatprep.subr.mxu0 0.0
  %392 = vmatpush1.msra.mxu0 0.0
  %393 = vmatprep.subr.mxu0 0.0
  %394 = vmatpush1.msra.mxu0 0.0
  %395 = vmatprep.subr.mxu0 0.0
  %396 = vmatpush1.msra.mxu0 0.0
  %397 = vmatprep.subr.mxu0 0.0
  %398 = vmatpush1.msra.mxu0 0.0
  %399 = vmatprep.subr.mxu0 0.0
  %400 = vmatpush1.msra.mxu0 0.0
  %401 = vmatprep.subr.mxu0 0.0
  %402 = vmatpush1.msra.mxu0 0.0
  %403 = vmatprep.subr.mxu0 %v371
  %404 = vmatpush1.msra.mxu0 %v368
  %405 = vmatprep.subr.mxu0 0.0
  %406 = vmatpush2.msra.mxu0 0.0
  %407 = vmatprep.subr.mxu0 0.0
  %408 = vmatpush2.msra.mxu0 0.0
  %409 = vmatprep.subr.mxu0 0.0
  %410 = vmatpush2.msra.mxu0 0.0
  %411 = vmatprep.subr.mxu0 0.0
  %412 = vmatpush2.msra.mxu0 0.0
  %413 = vmatprep.subr.mxu0 0.0
  %414 = vmatpush2.msra.mxu0 0.0
  %415 = vmatprep.subr.mxu0 0.0
  %416 = vmatpush2.msra.mxu0 0.0
  %417 = vmatprep.subr.mxu0 0.0
  %418 = vmatpush2.msra.mxu0 0.0
  %419 = vmatprep.subr.mxu0 0.0
  %420 = vmatpush2.msra.mxu0 0.0
  %421 = vmatprep.subr.mxu0 0.0
  %422 = vmatpush2.msra.mxu0 0.0
  %423 = vmatprep.subr.mxu0 0.0
  %424 = vmatpush2.msra.mxu0 0.0
  %425 = vmatprep.subr.mxu0 0.0
  %426 = vmatpush2.msra.mxu0 0.0
  %427 = vmatprep.subr.mxu0 0.0
  %428 = vmatpush2.msra.mxu0 0.0
  %429 = vmatprep.subr.mxu0 0.0
  %430 = vmatpush2.msra.mxu0 0.0
  %431 = vmatprep.subr.mxu0 0.0
  %432 = vmatpush2.msra.mxu0 0.0
  %433 = vmatprep.subr.mxu0 0.0
  %434 = vmatpush2.msra.mxu0 0.0
  %435 = vmatprep.subr.mxu0 0.0
  %436 = vmatpush2.msra.mxu0 0.0
  %437 = vmatprep.mubr.f32.mxu0 0.0
  %438 = vmatmul.mubr.f32.gmra.mxu0 %v365
  %v439 = vpop.f32.mrf.mxu0
  %v440 = vadd.f32 0.0, %v439
  %v441 = vpop.f32.mrf.mxu0
  %v442 = vadd.f32 0.0, %v441
  %443 = vdwg.mxu0
  %v444 = vadd.f32 %v340, %v440
  %v445 = vadd.f32 %v341, %v442
  %s446 = scalar_lea.vmem %s1, 32
  %v447 = vld [vmem:[%s446] sm:$0xff]
  %v449 = vsel %vm76, %v447, 0
  %v451 = vsel %vm80, %v27, 0
  %v453 = vsel %vm80, %v29, 0
  %455 = vmatprep.subr.mxu0 0.0
  %456 = vmatpush1.msra.mxu0 0.0
  %457 = vmatprep.subr.mxu0 0.0
  %458 = vmatpush1.msra.mxu0 0.0
  %459 = vmatprep.subr.mxu0 0.0
  %460 = vmatpush1.msra.mxu0 0.0
  %461 = vmatprep.subr.mxu0 0.0
  %462 = vmatpush1.msra.mxu0 0.0
  %463 = vmatprep.subr.mxu0 0.0
  %464 = vmatpush1.msra.mxu0 0.0
  %465 = vmatprep.subr.mxu0 0.0
  %466 = vmatpush1.msra.mxu0 0.0
  %467 = vmatprep.subr.mxu0 0.0
  %468 = vmatpush1.msra.mxu0 0.0
  %469 = vmatprep.subr.mxu0 0.0
  %470 = vmatpush1.msra.mxu0 0.0
  %471 = vmatprep.subr.mxu0 0.0
  %472 = vmatpush1.msra.mxu0 0.0
  %473 = vmatprep.subr.mxu0 0.0
  %474 = vmatpush1.msra.mxu0 0.0
  %475 = vmatprep.subr.mxu0 0.0
  %476 = vmatpush1.msra.mxu0 0.0
  %477 = vmatprep.subr.mxu0 0.0
  %478 = vmatpush1.msra.mxu0 0.0
  %479 = vmatprep.subr.mxu0 0.0
  %480 = vmatpush1.msra.mxu0 0.0
  %481 = vmatprep.subr.mxu0 0.0
  %482 = vmatpush1.msra.mxu0 0.0
  %483 = vmatprep.subr.mxu0 0.0
  %484 = vmatpush1.msra.mxu0 0.0
  %485 = vmatprep.subr.mxu0 %v453
  %486 = vmatpush1.msra.mxu0 %v451
  %487 = vmatprep.subr.mxu0 0.0
  %488 = vmatpush2.msra.mxu0 0.0
  %489 = vmatprep.subr.mxu0 0.0
  %490 = vmatpush2.msra.mxu0 0.0
  %491 = vmatprep.subr.mxu0 0.0
  %492 = vmatpush2.msra.mxu0 0.0
  %493 = vmatprep.subr.mxu0 0.0
  %494 = vmatpush2.msra.mxu0 0.0
  %495 = vmatprep.subr.mxu0 0.0
  %496 = vmatpush2.msra.mxu0 0.0
  %497 = vmatprep.subr.mxu0 0.0
  %498 = vmatpush2.msra.mxu0 0.0
  %499 = vmatprep.subr.mxu0 0.0
  %500 = vmatpush2.msra.mxu0 0.0
  %501 = vmatprep.subr.mxu0 0.0
  %502 = vmatpush2.msra.mxu0 0.0
  %503 = vmatprep.subr.mxu0 0.0
  %504 = vmatpush2.msra.mxu0 0.0
  %505 = vmatprep.subr.mxu0 0.0
  %506 = vmatpush2.msra.mxu0 0.0
  %507 = vmatprep.subr.mxu0 0.0
  %508 = vmatpush2.msra.mxu0 0.0
  %509 = vmatprep.subr.mxu0 0.0
  %510 = vmatpush2.msra.mxu0 0.0
  %511 = vmatprep.subr.mxu0 0.0
  %512 = vmatpush2.msra.mxu0 0.0
  %513 = vmatprep.subr.mxu0 0.0
  %514 = vmatpush2.msra.mxu0 0.0
  %515 = vmatprep.subr.mxu0 0.0
  %516 = vmatpush2.msra.mxu0 0.0
  %517 = vmatprep.subr.mxu0 0.0
  %518 = vmatpush2.msra.mxu0 0.0
  %519 = vmatprep.mubr.f32.mxu0 0.0
  %520 = vmatmul.mubr.f32.gmra.mxu0 %v449
  %v521 = vpop.f32.mrf.mxu0
  %v522 = vadd.f32 0.0, %v521
  %v523 = vpop.f32.mrf.mxu0
  %v524 = vadd.f32 0.0, %v523
  %525 = vdwg.mxu0
  %v526 = vadd.f32 %v444, %v522
  %v527 = vadd.f32 %v445, %v524
  %528 = vrot.lane.b32.xlu0 %v27, 127
  %v529 = vpop.permute.xlu0 %528
  %530 = vrot.lane.b32.xlu0 %v29, 127
  %v531 = vpop.permute.xlu0 %530
  %vm532 = vcmp.lt.s32.totalorder %v36, 127
  %v533 = vsel %vm532, %v529, %v531
  %v534 = vsel %vm532, %v531, %v529
  %v535 = vsel %vm22, 1, 0
  %v536 = vlaneseq
  %v537 = vshrl.u32 %v536, 7
  %v538 = vsub.s32 0, %v537
  %v539 = vrot.slane %v535, %v538
  %v540 = vlaneseq
  %v541 = vshrl.u32 %v540, 7
  %v542 = vsub.s32 1, %v541
  %v543 = vrot.slane %v535, %v542
  %vm544 = vcmp.eq.s32.totalorder %v539, 1
  %vm545 = vcmp.eq.s32.totalorder %v543, 1
  %v546 = vsel %vm544, %v533, 0.0
  %v547 = vsel %vm545, %v534, 0.0
  %s548 = scalar_lea.vmem %s1, 40
  %v549 = vld [vmem:[%s548] sm:$0xff]
  %v551 = vsel %vm76, %v549, 0
  %v554 = vsel %vm80, %v546, 0
  %v557 = vsel %vm80, %v547, 0
  %559 = vmatprep.subr.mxu0 0.0
  %560 = vmatpush1.msra.mxu0 0.0
  %561 = vmatprep.subr.mxu0 0.0
  %562 = vmatpush1.msra.mxu0 0.0
  %563 = vmatprep.subr.mxu0 0.0
  %564 = vmatpush1.msra.mxu0 0.0
  %565 = vmatprep.subr.mxu0 0.0
  %566 = vmatpush1.msra.mxu0 0.0
  %567 = vmatprep.subr.mxu0 0.0
  %568 = vmatpush1.msra.mxu0 0.0
  %569 = vmatprep.subr.mxu0 0.0
  %570 = vmatpush1.msra.mxu0 0.0
  %571 = vmatprep.subr.mxu0 0.0
  %572 = vmatpush1.msra.mxu0 0.0
  %573 = vmatprep.subr.mxu0 0.0
  %574 = vmatpush1.msra.mxu0 0.0
  %575 = vmatprep.subr.mxu0 0.0
  %576 = vmatpush1.msra.mxu0 0.0
  %577 = vmatprep.subr.mxu0 0.0
  %578 = vmatpush1.msra.mxu0 0.0
  %579 = vmatprep.subr.mxu0 0.0
  %580 = vmatpush1.msra.mxu0 0.0
  %581 = vmatprep.subr.mxu0 0.0
  %582 = vmatpush1.msra.mxu0 0.0
  %583 = vmatprep.subr.mxu0 0.0
  %584 = vmatpush1.msra.mxu0 0.0
  %585 = vmatprep.subr.mxu0 0.0
  %586 = vmatpush1.msra.mxu0 0.0
  %587 = vmatprep.subr.mxu0 0.0
  %588 = vmatpush1.msra.mxu0 0.0
  %589 = vmatprep.subr.mxu0 %v557
  %590 = vmatpush1.msra.mxu0 %v554
  %591 = vmatprep.subr.mxu0 0.0
  %592 = vmatpush2.msra.mxu0 0.0
  %593 = vmatprep.subr.mxu0 0.0
  %594 = vmatpush2.msra.mxu0 0.0
  %595 = vmatprep.subr.mxu0 0.0
  %596 = vmatpush2.msra.mxu0 0.0
  %597 = vmatprep.subr.mxu0 0.0
  %598 = vmatpush2.msra.mxu0 0.0
  %599 = vmatprep.subr.mxu0 0.0
  %600 = vmatpush2.msra.mxu0 0.0
  %601 = vmatprep.subr.mxu0 0.0
  %602 = vmatpush2.msra.mxu0 0.0
  %603 = vmatprep.subr.mxu0 0.0
  %604 = vmatpush2.msra.mxu0 0.0
  %605 = vmatprep.subr.mxu0 0.0
  %606 = vmatpush2.msra.mxu0 0.0
  %607 = vmatprep.subr.mxu0 0.0
  %608 = vmatpush2.msra.mxu0 0.0
  %609 = vmatprep.subr.mxu0 0.0
  %610 = vmatpush2.msra.mxu0 0.0
  %611 = vmatprep.subr.mxu0 0.0
  %612 = vmatpush2.msra.mxu0 0.0
  %613 = vmatprep.subr.mxu0 0.0
  %614 = vmatpush2.msra.mxu0 0.0
  %615 = vmatprep.subr.mxu0 0.0
  %616 = vmatpush2.msra.mxu0 0.0
  %617 = vmatprep.subr.mxu0 0.0
  %618 = vmatpush2.msra.mxu0 0.0
  %619 = vmatprep.subr.mxu0 0.0
  %620 = vmatpush2.msra.mxu0 0.0
  %621 = vmatprep.subr.mxu0 0.0
  %622 = vmatpush2.msra.mxu0 0.0
  %623 = vmatprep.mubr.f32.mxu0 0.0
  %624 = vmatmul.mubr.f32.gmra.mxu0 %v551
  %v625 = vpop.f32.mrf.mxu0
  %v626 = vadd.f32 0.0, %v625
  %v627 = vpop.f32.mrf.mxu0
  %v628 = vadd.f32 0.0, %v627
  %629 = vdwg.mxu0
  %v630 = vadd.f32 %v526, %v626
  %v631 = vadd.f32 %v527, %v628
  %632 = vrot.lane.b32.xlu0 %v27, 113
  %v633 = vpop.permute.xlu0 %632
  %634 = vrot.lane.b32.xlu0 %v29, 113
  %v635 = vpop.permute.xlu0 %634
  %vm636 = vcmp.lt.s32.totalorder %v36, 113
  %v637 = vsel %vm636, %v633, %v635
  %v638 = vsel %vm636, %v635, %v633
  %v639 = vsel %vm25, 1, 0
  %v640 = vlaneseq
  %v641 = vshrl.u32 %v640, 7
  %v642 = vsub.s32 0, %v641
  %v643 = vrot.slane %v639, %v642
  %v644 = vlaneseq
  %v645 = vshrl.u32 %v644, 7
  %v646 = vsub.s32 1, %v645
  %v647 = vrot.slane %v639, %v646
  %vm648 = vcmp.eq.s32.totalorder %v643, 1
  %vm649 = vcmp.eq.s32.totalorder %v647, 1
  %v650 = vsel %vm648, %v637, 0.0
  %v651 = vsel %vm649, %v638, 0.0
  %s652 = scalar_lea.vmem %s1, 48
  %v653 = vld [vmem:[%s652] sm:$0xff]
  %v655 = vsel %vm76, %v653, 0
  %v658 = vsel %vm80, %v650, 0
  %v661 = vsel %vm80, %v651, 0
  %663 = vmatprep.subr.mxu0 0.0
  %664 = vmatpush1.msra.mxu0 0.0
  %665 = vmatprep.subr.mxu0 0.0
  %666 = vmatpush1.msra.mxu0 0.0
  %667 = vmatprep.subr.mxu0 0.0
  %668 = vmatpush1.msra.mxu0 0.0
  %669 = vmatprep.subr.mxu0 0.0
  %670 = vmatpush1.msra.mxu0 0.0
  %671 = vmatprep.subr.mxu0 0.0
  %672 = vmatpush1.msra.mxu0 0.0
  %673 = vmatprep.subr.mxu0 0.0
  %674 = vmatpush1.msra.mxu0 0.0
  %675 = vmatprep.subr.mxu0 0.0
  %676 = vmatpush1.msra.mxu0 0.0
  %677 = vmatprep.subr.mxu0 0.0
  %678 = vmatpush1.msra.mxu0 0.0
  %679 = vmatprep.subr.mxu0 0.0
  %680 = vmatpush1.msra.mxu0 0.0
  %681 = vmatprep.subr.mxu0 0.0
  %682 = vmatpush1.msra.mxu0 0.0
  %683 = vmatprep.subr.mxu0 0.0
  %684 = vmatpush1.msra.mxu0 0.0
  %685 = vmatprep.subr.mxu0 0.0
  %686 = vmatpush1.msra.mxu0 0.0
  %687 = vmatprep.subr.mxu0 0.0
  %688 = vmatpush1.msra.mxu0 0.0
  %689 = vmatprep.subr.mxu0 0.0
  %690 = vmatpush1.msra.mxu0 0.0
  %691 = vmatprep.subr.mxu0 0.0
  %692 = vmatpush1.msra.mxu0 0.0
  %693 = vmatprep.subr.mxu0 %v661
  %694 = vmatpush1.msra.mxu0 %v658
  %695 = vmatprep.subr.mxu0 0.0
  %696 = vmatpush2.msra.mxu0 0.0
  %697 = vmatprep.subr.mxu0 0.0
  %698 = vmatpush2.msra.mxu0 0.0
  %699 = vmatprep.subr.mxu0 0.0
  %700 = vmatpush2.msra.mxu0 0.0
  %701 = vmatprep.subr.mxu0 0.0
  %702 = vmatpush2.msra.mxu0 0.0
  %703 = vmatprep.subr.mxu0 0.0
  %704 = vmatpush2.msra.mxu0 0.0
  %705 = vmatprep.subr.mxu0 0.0
  %706 = vmatpush2.msra.mxu0 0.0
  %707 = vmatprep.subr.mxu0 0.0
  %708 = vmatpush2.msra.mxu0 0.0
  %709 = vmatprep.subr.mxu0 0.0
  %710 = vmatpush2.msra.mxu0 0.0
  %711 = vmatprep.subr.mxu0 0.0
  %712 = vmatpush2.msra.mxu0 0.0
  %713 = vmatprep.subr.mxu0 0.0
  %714 = vmatpush2.msra.mxu0 0.0
  %715 = vmatprep.subr.mxu0 0.0
  %716 = vmatpush2.msra.mxu0 0.0
  %717 = vmatprep.subr.mxu0 0.0
  %718 = vmatpush2.msra.mxu0 0.0
  %719 = vmatprep.subr.mxu0 0.0
  %720 = vmatpush2.msra.mxu0 0.0
  %721 = vmatprep.subr.mxu0 0.0
  %722 = vmatpush2.msra.mxu0 0.0
  %723 = vmatprep.subr.mxu0 0.0
  %724 = vmatpush2.msra.mxu0 0.0
  %725 = vmatprep.subr.mxu0 0.0
  %726 = vmatpush2.msra.mxu0 0.0
  %727 = vmatprep.mubr.f32.mxu0 0.0
  %728 = vmatmul.mubr.f32.gmra.mxu0 %v655
  %v729 = vpop.f32.mrf.mxu0
  %v730 = vadd.f32 0.0, %v729
  %v731 = vpop.f32.mrf.mxu0
  %v732 = vadd.f32 0.0, %v731
  %733 = vdwg.mxu0
  %v734 = vadd.f32 %v630, %v730
  %v735 = vadd.f32 %v631, %v732
  %736 = vrot.lane.b32.xlu0 %v27, 112
  %v737 = vpop.permute.xlu0 %736
  %738 = vrot.lane.b32.xlu0 %v29, 112
  %v739 = vpop.permute.xlu0 %738
  %vm740 = vcmp.lt.s32.totalorder %v36, 112
  %v741 = vsel %vm740, %v737, %v739
  %v742 = vsel %vm740, %v739, %v737
  %v743 = vsel %vm24, 1, 0
  %v744 = vlaneseq
  %v745 = vshrl.u32 %v744, 7
  %v746 = vsub.s32 0, %v745
  %v747 = vrot.slane %v743, %v746
  %v748 = vlaneseq
  %v749 = vshrl.u32 %v748, 7
  %v750 = vsub.s32 1, %v749
  %v751 = vrot.slane %v743, %v750
  %vm752 = vcmp.eq.s32.totalorder %v747, 1
  %vm753 = vcmp.eq.s32.totalorder %v751, 1
  %v754 = vsel %vm752, %v741, 0.0
  %v755 = vsel %vm753, %v742, 0.0
  %s756 = scalar_lea.vmem %s1, 56
  %v757 = vld [vmem:[%s756] sm:$0xff]
  %v759 = vsel %vm76, %v757, 0
  %v762 = vsel %vm80, %v754, 0
  %v765 = vsel %vm80, %v755, 0
  %767 = vmatprep.subr.mxu0 0.0
  %768 = vmatpush1.msra.mxu0 0.0
  %769 = vmatprep.subr.mxu0 0.0
  %770 = vmatpush1.msra.mxu0 0.0
  %771 = vmatprep.subr.mxu0 0.0
  %772 = vmatpush1.msra.mxu0 0.0
  %773 = vmatprep.subr.mxu0 0.0
  %774 = vmatpush1.msra.mxu0 0.0
  %775 = vmatprep.subr.mxu0 0.0
  %776 = vmatpush1.msra.mxu0 0.0
  %777 = vmatprep.subr.mxu0 0.0
  %778 = vmatpush1.msra.mxu0 0.0
  %779 = vmatprep.subr.mxu0 0.0
  %780 = vmatpush1.msra.mxu0 0.0
  %781 = vmatprep.subr.mxu0 0.0
  %782 = vmatpush1.msra.mxu0 0.0
  %783 = vmatprep.subr.mxu0 0.0
  %784 = vmatpush1.msra.mxu0 0.0
  %785 = vmatprep.subr.mxu0 0.0
  %786 = vmatpush1.msra.mxu0 0.0
  %787 = vmatprep.subr.mxu0 0.0
  %788 = vmatpush1.msra.mxu0 0.0
  %789 = vmatprep.subr.mxu0 0.0
  %790 = vmatpush1.msra.mxu0 0.0
  %791 = vmatprep.subr.mxu0 0.0
  %792 = vmatpush1.msra.mxu0 0.0
  %793 = vmatprep.subr.mxu0 0.0
  %794 = vmatpush1.msra.mxu0 0.0
  %795 = vmatprep.subr.mxu0 0.0
  %796 = vmatpush1.msra.mxu0 0.0
  %797 = vmatprep.subr.mxu0 %v765
  %798 = vmatpush1.msra.mxu0 %v762
  %799 = vmatprep.subr.mxu0 0.0
  %800 = vmatpush2.msra.mxu0 0.0
  %801 = vmatprep.subr.mxu0 0.0
  %802 = vmatpush2.msra.mxu0 0.0
  %803 = vmatprep.subr.mxu0 0.0
  %804 = vmatpush2.msra.mxu0 0.0
  %805 = vmatprep.subr.mxu0 0.0
  %806 = vmatpush2.msra.mxu0 0.0
  %807 = vmatprep.subr.mxu0 0.0
  %808 = vmatpush2.msra.mxu0 0.0
  %809 = vmatprep.subr.mxu0 0.0
  %810 = vmatpush2.msra.mxu0 0.0
  %811 = vmatprep.subr.mxu0 0.0
  %812 = vmatpush2.msra.mxu0 0.0
  %813 = vmatprep.subr.mxu0 0.0
  %814 = vmatpush2.msra.mxu0 0.0
  %815 = vmatprep.subr.mxu0 0.0
  %816 = vmatpush2.msra.mxu0 0.0
  %817 = vmatprep.subr.mxu0 0.0
  %818 = vmatpush2.msra.mxu0 0.0
  %819 = vmatprep.subr.mxu0 0.0
  %820 = vmatpush2.msra.mxu0 0.0
  %821 = vmatprep.subr.mxu0 0.0
  %822 = vmatpush2.msra.mxu0 0.0
  %823 = vmatprep.subr.mxu0 0.0
  %824 = vmatpush2.msra.mxu0 0.0
  %825 = vmatprep.subr.mxu0 0.0
  %826 = vmatpush2.msra.mxu0 0.0
  %827 = vmatprep.subr.mxu0 0.0
  %828 = vmatpush2.msra.mxu0 0.0
  %829 = vmatprep.subr.mxu0 0.0
  %830 = vmatpush2.msra.mxu0 0.0
  %831 = vmatprep.mubr.f32.mxu0 0.0
  %832 = vmatmul.mubr.f32.gmra.mxu0 %v759
  %v833 = vpop.f32.mrf.mxu0
  %v834 = vadd.f32 0.0, %v833
  %v835 = vpop.f32.mrf.mxu0
  %v836 = vadd.f32 0.0, %v835
  %837 = vdwg.mxu0
  %v838 = vadd.f32 %v734, %v834
  %v839 = vadd.f32 %v735, %v836
  %840 = vrot.lane.b32.xlu0 %v27, 111
  %v841 = vpop.permute.xlu0 %840
  %842 = vrot.lane.b32.xlu0 %v29, 111
  %v843 = vpop.permute.xlu0 %842
  %vm844 = vcmp.lt.s32.totalorder %v36, 111
  %v845 = vsel %vm844, %v841, %v843
  %v846 = vsel %vm844, %v843, %v841
  %v847 = vsel %vm26, 1, 0
  %v848 = vlaneseq
  %v849 = vshrl.u32 %v848, 7
  %v850 = vsub.s32 0, %v849
  %v851 = vrot.slane %v847, %v850
  %v852 = vlaneseq
  %v853 = vshrl.u32 %v852, 7
  %v854 = vsub.s32 1, %v853
  %v855 = vrot.slane %v847, %v854
  %vm856 = vcmp.eq.s32.totalorder %v851, 1
  %vm857 = vcmp.eq.s32.totalorder %v855, 1
  %v858 = vsel %vm856, %v845, 0.0
  %v859 = vsel %vm857, %v846, 0.0
  %s860 = scalar_lea.vmem %s1, 64
  %v861 = vld [vmem:[%s860] sm:$0xff]
  %v863 = vsel %vm76, %v861, 0
  %v866 = vsel %vm80, %v858, 0
  %v869 = vsel %vm80, %v859, 0
  %871 = vmatprep.subr.mxu0 0.0
  %872 = vmatpush1.msra.mxu0 0.0
  %873 = vmatprep.subr.mxu0 0.0
  %874 = vmatpush1.msra.mxu0 0.0
  %875 = vmatprep.subr.mxu0 0.0
  %876 = vmatpush1.msra.mxu0 0.0
  %877 = vmatprep.subr.mxu0 0.0
  %878 = vmatpush1.msra.mxu0 0.0
  %879 = vmatprep.subr.mxu0 0.0
  %880 = vmatpush1.msra.mxu0 0.0
  %881 = vmatprep.subr.mxu0 0.0
  %882 = vmatpush1.msra.mxu0 0.0
  %883 = vmatprep.subr.mxu0 0.0
  %884 = vmatpush1.msra.mxu0 0.0
  %885 = vmatprep.subr.mxu0 0.0
  %886 = vmatpush1.msra.mxu0 0.0
  %887 = vmatprep.subr.mxu0 0.0
  %888 = vmatpush1.msra.mxu0 0.0
  %889 = vmatprep.subr.mxu0 0.0
  %890 = vmatpush1.msra.mxu0 0.0
  %891 = vmatprep.subr.mxu0 0.0
  %892 = vmatpush1.msra.mxu0 0.0
  %893 = vmatprep.subr.mxu0 0.0
  %894 = vmatpush1.msra.mxu0 0.0
  %895 = vmatprep.subr.mxu0 0.0
  %896 = vmatpush1.msra.mxu0 0.0
  %897 = vmatprep.subr.mxu0 0.0
  %898 = vmatpush1.msra.mxu0 0.0
  %899 = vmatprep.subr.mxu0 0.0
  %900 = vmatpush1.msra.mxu0 0.0
  %901 = vmatprep.subr.mxu0 %v869
  %902 = vmatpush1.msra.mxu0 %v866
  %903 = vmatprep.subr.mxu0 0.0
  %904 = vmatpush2.msra.mxu0 0.0
  %905 = vmatprep.subr.mxu0 0.0
  %906 = vmatpush2.msra.mxu0 0.0
  %907 = vmatprep.subr.mxu0 0.0
  %908 = vmatpush2.msra.mxu0 0.0
  %909 = vmatprep.subr.mxu0 0.0
  %910 = vmatpush2.msra.mxu0 0.0
  %911 = vmatprep.subr.mxu0 0.0
  %912 = vmatpush2.msra.mxu0 0.0
  %913 = vmatprep.subr.mxu0 0.0
  %914 = vmatpush2.msra.mxu0 0.0
  %915 = vmatprep.subr.mxu0 0.0
  %916 = vmatpush2.msra.mxu0 0.0
  %917 = vmatprep.subr.mxu0 0.0
  %918 = vmatpush2.msra.mxu0 0.0
  %919 = vmatprep.subr.mxu0 0.0
  %920 = vmatpush2.msra.mxu0 0.0
  %921 = vmatprep.subr.mxu0 0.0
  %922 = vmatpush2.msra.mxu0 0.0
  %923 = vmatprep.subr.mxu0 0.0
  %924 = vmatpush2.msra.mxu0 0.0
  %925 = vmatprep.subr.mxu0 0.0
  %926 = vmatpush2.msra.mxu0 0.0
  %927 = vmatprep.subr.mxu0 0.0
  %928 = vmatpush2.msra.mxu0 0.0
  %929 = vmatprep.subr.mxu0 0.0
  %930 = vmatpush2.msra.mxu0 0.0
  %931 = vmatprep.subr.mxu0 0.0
  %932 = vmatpush2.msra.mxu0 0.0
  %933 = vmatprep.subr.mxu0 0.0
  %934 = vmatpush2.msra.mxu0 0.0
  %935 = vmatprep.mubr.f32.mxu0 0.0
  %936 = vmatmul.mubr.f32.gmra.mxu0 %v863
  %v937 = vpop.f32.mrf.mxu0
  %v938 = vadd.f32 0.0, %v937
  %v939 = vpop.f32.mrf.mxu0
  %v940 = vadd.f32 0.0, %v939
  %941 = vdwg.mxu0
  %v942 = vadd.f32 %v838, %v938
  %v943 = vadd.f32 %v839, %v940
  %v944 = vadd.f32 %v942, %v943
  %945 = vadd.xlane.f32.xlu0 %v944
  %v946 = vpop.xlane.xlu0 %945
  %v947 = vmul.f32 %v946, 0.00390625
  %v948 = vsub.f32 %v942, %v947
  %v949 = vsub.f32 %v943, %v947
  %v950 = vmul.f32 %v948, %v948
  %v951 = vmul.f32 %v949, %v949
  %v952 = vadd.f32 %v950, %v951
  %953 = vadd.xlane.f32.xlu0 %v952
  %v954 = vpop.xlane.xlu0 %953
  %vm955 = vcmask 7168
  %v956 = vsel %vm955, %v946, %v954
  %vm957 = vcmask 15360
  %958 = vst.msk [vmem:[%s4] sm:$0xff] %vm957, %v956
  %s959 = scalar_lea.vmem %s0, 8
  %v960 = vld [vmem:[%s959] sm:$0xff]
  %v962 = vcombine.high %v960, %v960
  %964 = vrot.lane.b32.xlu0 %v960, 17
  %v965 = vpop.permute.xlu0 %964
  %966 = vrot.lane.b32.xlu0 %v962, 17
  %v967 = vpop.permute.xlu0 %966
  %v968 = vsel %vm37, %v965, %v967
  %v969 = vsel %vm37, %v967, %v965
  %v970 = vsel %vm49, %v969, 0.0
  %v971 = vsel %vm50, %v968, 0.0
  %v972 = vld [vmem:[%s1] sm:$0xff]
  %973 = vrot.lane.b32.xlu0 %v960, 16
  %v974 = vpop.permute.xlu0 %973
  %975 = vrot.lane.b32.xlu0 %v962, 16
  %v976 = vpop.permute.xlu0 %975
  %v977 = vsel %vm58, %v974, %v976
  %v978 = vsel %vm58, %v976, %v974
  %v979 = vsel %vm70, %v978, 0.0
  %v980 = vsel %vm71, %v977, 0.0
  %v981 = vld [vmem:[%s74] sm:$0xff]
  %v983 = vsel %vm76, %v981, 0
  %v986 = vsel %vm80, %v979, 0
  %v989 = vsel %vm80, %v980, 0
  %991 = vmatprep.subr.mxu0 0.0
  %992 = vmatpush1.msra.mxu0 0.0
  %993 = vmatprep.subr.mxu0 0.0
  %994 = vmatpush1.msra.mxu0 0.0
  %995 = vmatprep.subr.mxu0 0.0
  %996 = vmatpush1.msra.mxu0 0.0
  %997 = vmatprep.subr.mxu0 0.0
  %998 = vmatpush1.msra.mxu0 0.0
  %999 = vmatprep.subr.mxu0 0.0
  %1000 = vmatpush1.msra.mxu0 0.0
  %1001 = vmatprep.subr.mxu0 0.0
  %1002 = vmatpush1.msra.mxu0 0.0
  %1003 = vmatprep.subr.mxu0 0.0
  %1004 = vmatpush1.msra.mxu0 0.0
  %1005 = vmatprep.subr.mxu0 0.0
  %1006 = vmatpush1.msra.mxu0 0.0
  %1007 = vmatprep.subr.mxu0 0.0
  %1008 = vmatpush1.msra.mxu0 0.0
  %1009 = vmatprep.subr.mxu0 0.0
  %1010 = vmatpush1.msra.mxu0 0.0
  %1011 = vmatprep.subr.mxu0 0.0
  %1012 = vmatpush1.msra.mxu0 0.0
  %1013 = vmatprep.subr.mxu0 0.0
  %1014 = vmatpush1.msra.mxu0 0.0
  %1015 = vmatprep.subr.mxu0 0.0
  %1016 = vmatpush1.msra.mxu0 0.0
  %1017 = vmatprep.subr.mxu0 0.0
  %1018 = vmatpush1.msra.mxu0 0.0
  %1019 = vmatprep.subr.mxu0 0.0
  %1020 = vmatpush1.msra.mxu0 0.0
  %1021 = vmatprep.subr.mxu0 %v989
  %1022 = vmatpush1.msra.mxu0 %v986
  %1023 = vmatprep.subr.mxu0 0.0
  %1024 = vmatpush2.msra.mxu0 0.0
  %1025 = vmatprep.subr.mxu0 0.0
  %1026 = vmatpush2.msra.mxu0 0.0
  %1027 = vmatprep.subr.mxu0 0.0
  %1028 = vmatpush2.msra.mxu0 0.0
  %1029 = vmatprep.subr.mxu0 0.0
  %1030 = vmatpush2.msra.mxu0 0.0
  %1031 = vmatprep.subr.mxu0 0.0
  %1032 = vmatpush2.msra.mxu0 0.0
  %1033 = vmatprep.subr.mxu0 0.0
  %1034 = vmatpush2.msra.mxu0 0.0
  %1035 = vmatprep.subr.mxu0 0.0
  %1036 = vmatpush2.msra.mxu0 0.0
  %1037 = vmatprep.subr.mxu0 0.0
  %1038 = vmatpush2.msra.mxu0 0.0
  %1039 = vmatprep.subr.mxu0 0.0
  %1040 = vmatpush2.msra.mxu0 0.0
  %1041 = vmatprep.subr.mxu0 0.0
  %1042 = vmatpush2.msra.mxu0 0.0
  %1043 = vmatprep.subr.mxu0 0.0
  %1044 = vmatpush2.msra.mxu0 0.0
  %1045 = vmatprep.subr.mxu0 0.0
  %1046 = vmatpush2.msra.mxu0 0.0
  %1047 = vmatprep.subr.mxu0 0.0
  %1048 = vmatpush2.msra.mxu0 0.0
  %1049 = vmatprep.subr.mxu0 0.0
  %1050 = vmatpush2.msra.mxu0 0.0
  %1051 = vmatprep.subr.mxu0 0.0
  %1052 = vmatpush2.msra.mxu0 0.0
  %1053 = vmatprep.subr.mxu0 0.0
  %1054 = vmatpush2.msra.mxu0 0.0
  %1055 = vmatprep.mubr.f32.mxu0 0.0
  %1056 = vmatmul.mubr.f32.gmra.mxu0 %v983
  %v1057 = vpop.f32.mrf.mxu0
  %v1058 = vadd.f32 0.0, %v1057
  %v1059 = vpop.f32.mrf.mxu0
  %v1060 = vadd.f32 0.0, %v1059
  %1061 = vdwg.mxu0
  %v1063 = vsel %vm76, %v972, 0
  %v1066 = vsel %vm80, %v970, 0
  %v1069 = vsel %vm80, %v971, 0
  %1071 = vmatprep.subr.mxu0 0.0
  %1072 = vmatpush1.msra.mxu0 0.0
  %1073 = vmatprep.subr.mxu0 0.0
  %1074 = vmatpush1.msra.mxu0 0.0
  %1075 = vmatprep.subr.mxu0 0.0
  %1076 = vmatpush1.msra.mxu0 0.0
  %1077 = vmatprep.subr.mxu0 0.0
  %1078 = vmatpush1.msra.mxu0 0.0
  %1079 = vmatprep.subr.mxu0 0.0
  %1080 = vmatpush1.msra.mxu0 0.0
  %1081 = vmatprep.subr.mxu0 0.0
  %1082 = vmatpush1.msra.mxu0 0.0
  %1083 = vmatprep.subr.mxu0 0.0
  %1084 = vmatpush1.msra.mxu0 0.0
  %1085 = vmatprep.subr.mxu0 0.0
  %1086 = vmatpush1.msra.mxu0 0.0
  %1087 = vmatprep.subr.mxu0 0.0
  %1088 = vmatpush1.msra.mxu0 0.0
  %1089 = vmatprep.subr.mxu0 0.0
  %1090 = vmatpush1.msra.mxu0 0.0
  %1091 = vmatprep.subr.mxu0 0.0
  %1092 = vmatpush1.msra.mxu0 0.0
  %1093 = vmatprep.subr.mxu0 0.0
  %1094 = vmatpush1.msra.mxu0 0.0
  %1095 = vmatprep.subr.mxu0 0.0
  %1096 = vmatpush1.msra.mxu0 0.0
  %1097 = vmatprep.subr.mxu0 0.0
  %1098 = vmatpush1.msra.mxu0 0.0
  %1099 = vmatprep.subr.mxu0 0.0
  %1100 = vmatpush1.msra.mxu0 0.0
  %1101 = vmatprep.subr.mxu0 %v1069
  %1102 = vmatpush1.msra.mxu0 %v1066
  %1103 = vmatprep.subr.mxu0 0.0
  %1104 = vmatpush2.msra.mxu0 0.0
  %1105 = vmatprep.subr.mxu0 0.0
  %1106 = vmatpush2.msra.mxu0 0.0
  %1107 = vmatprep.subr.mxu0 0.0
  %1108 = vmatpush2.msra.mxu0 0.0
  %1109 = vmatprep.subr.mxu0 0.0
  %1110 = vmatpush2.msra.mxu0 0.0
  %1111 = vmatprep.subr.mxu0 0.0
  %1112 = vmatpush2.msra.mxu0 0.0
  %1113 = vmatprep.subr.mxu0 0.0
  %1114 = vmatpush2.msra.mxu0 0.0
  %1115 = vmatprep.subr.mxu0 0.0
  %1116 = vmatpush2.msra.mxu0 0.0
  %1117 = vmatprep.subr.mxu0 0.0
  %1118 = vmatpush2.msra.mxu0 0.0
  %1119 = vmatprep.subr.mxu0 0.0
  %1120 = vmatpush2.msra.mxu0 0.0
  %1121 = vmatprep.subr.mxu0 0.0
  %1122 = vmatpush2.msra.mxu0 0.0
  %1123 = vmatprep.subr.mxu0 0.0
  %1124 = vmatpush2.msra.mxu0 0.0
  %1125 = vmatprep.subr.mxu0 0.0
  %1126 = vmatpush2.msra.mxu0 0.0
  %1127 = vmatprep.subr.mxu0 0.0
  %1128 = vmatpush2.msra.mxu0 0.0
  %1129 = vmatprep.subr.mxu0 0.0
  %1130 = vmatpush2.msra.mxu0 0.0
  %1131 = vmatprep.subr.mxu0 0.0
  %1132 = vmatpush2.msra.mxu0 0.0
  %1133 = vmatprep.subr.mxu0 0.0
  %1134 = vmatpush2.msra.mxu0 0.0
  %1135 = vmatprep.mubr.f32.mxu0 0.0
  %1136 = vmatmul.mubr.f32.gmra.mxu0 %v1063
  %v1137 = vpop.f32.mrf.mxu0
  %v1138 = vadd.f32 %v1058, %v1137
  %v1139 = vpop.f32.mrf.mxu0
  %v1140 = vadd.f32 %v1060, %v1139
  %1141 = vdwg.mxu0
  %1142 = vrot.lane.b32.xlu0 %v960, 15
  %v1143 = vpop.permute.xlu0 %1142
  %1144 = vrot.lane.b32.xlu0 %v962, 15
  %v1145 = vpop.permute.xlu0 %1144
  %v1146 = vsel %vm242, %v1143, %v1145
  %v1147 = vsel %vm242, %v1145, %v1143
  %v1148 = vsel %vm254, %v1147, 0.0
  %v1149 = vsel %vm255, %v1146, 0.0
  %v1150 = vld [vmem:[%s258] sm:$0xff]
  %v1152 = vsel %vm76, %v1150, 0
  %v1155 = vsel %vm80, %v1148, 0
  %v1158 = vsel %vm80, %v1149, 0
  %1160 = vmatprep.subr.mxu0 0.0
  %1161 = vmatpush1.msra.mxu0 0.0
  %1162 = vmatprep.subr.mxu0 0.0
  %1163 = vmatpush1.msra.mxu0 0.0
  %1164 = vmatprep.subr.mxu0 0.0
  %1165 = vmatpush1.msra.mxu0 0.0
  %1166 = vmatprep.subr.mxu0 0.0
  %1167 = vmatpush1.msra.mxu0 0.0
  %1168 = vmatprep.subr.mxu0 0.0
  %1169 = vmatpush1.msra.mxu0 0.0
  %1170 = vmatprep.subr.mxu0 0.0
  %1171 = vmatpush1.msra.mxu0 0.0
  %1172 = vmatprep.subr.mxu0 0.0
  %1173 = vmatpush1.msra.mxu0 0.0
  %1174 = vmatprep.subr.mxu0 0.0
  %1175 = vmatpush1.msra.mxu0 0.0
  %1176 = vmatprep.subr.mxu0 0.0
  %1177 = vmatpush1.msra.mxu0 0.0
  %1178 = vmatprep.subr.mxu0 0.0
  %1179 = vmatpush1.msra.mxu0 0.0
  %1180 = vmatprep.subr.mxu0 0.0
  %1181 = vmatpush1.msra.mxu0 0.0
  %1182 = vmatprep.subr.mxu0 0.0
  %1183 = vmatpush1.msra.mxu0 0.0
  %1184 = vmatprep.subr.mxu0 0.0
  %1185 = vmatpush1.msra.mxu0 0.0
  %1186 = vmatprep.subr.mxu0 0.0
  %1187 = vmatpush1.msra.mxu0 0.0
  %1188 = vmatprep.subr.mxu0 0.0
  %1189 = vmatpush1.msra.mxu0 0.0
  %1190 = vmatprep.subr.mxu0 %v1158
  %1191 = vmatpush1.msra.mxu0 %v1155
  %1192 = vmatprep.subr.mxu0 0.0
  %1193 = vmatpush2.msra.mxu0 0.0
  %1194 = vmatprep.subr.mxu0 0.0
  %1195 = vmatpush2.msra.mxu0 0.0
  %1196 = vmatprep.subr.mxu0 0.0
  %1197 = vmatpush2.msra.mxu0 0.0
  %1198 = vmatprep.subr.mxu0 0.0
  %1199 = vmatpush2.msra.mxu0 0.0
  %1200 = vmatprep.subr.mxu0 0.0
  %1201 = vmatpush2.msra.mxu0 0.0
  %1202 = vmatprep.subr.mxu0 0.0
  %1203 = vmatpush2.msra.mxu0 0.0
  %1204 = vmatprep.subr.mxu0 0.0
  %1205 = vmatpush2.msra.mxu0 0.0
  %1206 = vmatprep.subr.mxu0 0.0
  %1207 = vmatpush2.msra.mxu0 0.0
  %1208 = vmatprep.subr.mxu0 0.0
  %1209 = vmatpush2.msra.mxu0 0.0
  %1210 = vmatprep.subr.mxu0 0.0
  %1211 = vmatpush2.msra.mxu0 0.0
  %1212 = vmatprep.subr.mxu0 0.0
  %1213 = vmatpush2.msra.mxu0 0.0
  %1214 = vmatprep.subr.mxu0 0.0
  %1215 = vmatpush2.msra.mxu0 0.0
  %1216 = vmatprep.subr.mxu0 0.0
  %1217 = vmatpush2.msra.mxu0 0.0
  %1218 = vmatprep.subr.mxu0 0.0
  %1219 = vmatpush2.msra.mxu0 0.0
  %1220 = vmatprep.subr.mxu0 0.0
  %1221 = vmatpush2.msra.mxu0 0.0
  %1222 = vmatprep.subr.mxu0 0.0
  %1223 = vmatpush2.msra.mxu0 0.0
  %1224 = vmatprep.mubr.f32.mxu0 0.0
  %1225 = vmatmul.mubr.f32.gmra.mxu0 %v1152
  %v1226 = vpop.f32.mrf.mxu0
  %v1227 = vadd.f32 0.0, %v1226
  %v1228 = vpop.f32.mrf.mxu0
  %v1229 = vadd.f32 0.0, %v1228
  %1230 = vdwg.mxu0
  %v1231 = vadd.f32 %v1138, %v1227
  %v1232 = vadd.f32 %v1140, %v1229
  %1233 = vrot.lane.b32.xlu0 %v960, 1
  %v1234 = vpop.permute.xlu0 %1233
  %1235 = vrot.lane.b32.xlu0 %v962, 1
  %v1236 = vpop.permute.xlu0 %1235
  %v1237 = vsel %vm346, %v1234, %v1236
  %v1238 = vsel %vm346, %v1236, %v1234
  %v1239 = vsel %vm358, %v1238, 0.0
  %v1240 = vsel %vm359, %v1237, 0.0
  %v1241 = vld [vmem:[%s362] sm:$0xff]
  %v1243 = vsel %vm76, %v1241, 0
  %v1246 = vsel %vm80, %v1239, 0
  %v1249 = vsel %vm80, %v1240, 0
  %1251 = vmatprep.subr.mxu0 0.0
  %1252 = vmatpush1.msra.mxu0 0.0
  %1253 = vmatprep.subr.mxu0 0.0
  %1254 = vmatpush1.msra.mxu0 0.0
  %1255 = vmatprep.subr.mxu0 0.0
  %1256 = vmatpush1.msra.mxu0 0.0
  %1257 = vmatprep.subr.mxu0 0.0
  %1258 = vmatpush1.msra.mxu0 0.0
  %1259 = vmatprep.subr.mxu0 0.0
  %1260 = vmatpush1.msra.mxu0 0.0
  %1261 = vmatprep.subr.mxu0 0.0
  %1262 = vmatpush1.msra.mxu0 0.0
  %1263 = vmatprep.subr.mxu0 0.0
  %1264 = vmatpush1.msra.mxu0 0.0
  %1265 = vmatprep.subr.mxu0 0.0
  %1266 = vmatpush1.msra.mxu0 0.0
  %1267 = vmatprep.subr.mxu0 0.0
  %1268 = vmatpush1.msra.mxu0 0.0
  %1269 = vmatprep.subr.mxu0 0.0
  %1270 = vmatpush1.msra.mxu0 0.0
  %1271 = vmatprep.subr.mxu0 0.0
  %1272 = vmatpush1.msra.mxu0 0.0
  %1273 = vmatprep.subr.mxu0 0.0
  %1274 = vmatpush1.msra.mxu0 0.0
  %1275 = vmatprep.subr.mxu0 0.0
  %1276 = vmatpush1.msra.mxu0 0.0
  %1277 = vmatprep.subr.mxu0 0.0
  %1278 = vmatpush1.msra.mxu0 0.0
  %1279 = vmatprep.subr.mxu0 0.0
  %1280 = vmatpush1.msra.mxu0 0.0
  %1281 = vmatprep.subr.mxu0 %v1249
  %1282 = vmatpush1.msra.mxu0 %v1246
  %1283 = vmatprep.subr.mxu0 0.0
  %1284 = vmatpush2.msra.mxu0 0.0
  %1285 = vmatprep.subr.mxu0 0.0
  %1286 = vmatpush2.msra.mxu0 0.0
  %1287 = vmatprep.subr.mxu0 0.0
  %1288 = vmatpush2.msra.mxu0 0.0
  %1289 = vmatprep.subr.mxu0 0.0
  %1290 = vmatpush2.msra.mxu0 0.0
  %1291 = vmatprep.subr.mxu0 0.0
  %1292 = vmatpush2.msra.mxu0 0.0
  %1293 = vmatprep.subr.mxu0 0.0
  %1294 = vmatpush2.msra.mxu0 0.0
  %1295 = vmatprep.subr.mxu0 0.0
  %1296 = vmatpush2.msra.mxu0 0.0
  %1297 = vmatprep.subr.mxu0 0.0
  %1298 = vmatpush2.msra.mxu0 0.0
  %1299 = vmatprep.subr.mxu0 0.0
  %1300 = vmatpush2.msra.mxu0 0.0
  %1301 = vmatprep.subr.mxu0 0.0
  %1302 = vmatpush2.msra.mxu0 0.0
  %1303 = vmatprep.subr.mxu0 0.0
  %1304 = vmatpush2.msra.mxu0 0.0
  %1305 = vmatprep.subr.mxu0 0.0
  %1306 = vmatpush2.msra.mxu0 0.0
  %1307 = vmatprep.subr.mxu0 0.0
  %1308 = vmatpush2.msra.mxu0 0.0
  %1309 = vmatprep.subr.mxu0 0.0
  %1310 = vmatpush2.msra.mxu0 0.0
  %1311 = vmatprep.subr.mxu0 0.0
  %1312 = vmatpush2.msra.mxu0 0.0
  %1313 = vmatprep.subr.mxu0 0.0
  %1314 = vmatpush2.msra.mxu0 0.0
  %1315 = vmatprep.mubr.f32.mxu0 0.0
  %1316 = vmatmul.mubr.f32.gmra.mxu0 %v1243
  %v1317 = vpop.f32.mrf.mxu0
  %v1318 = vadd.f32 0.0, %v1317
  %v1319 = vpop.f32.mrf.mxu0
  %v1320 = vadd.f32 0.0, %v1319
  %1321 = vdwg.mxu0
  %v1322 = vadd.f32 %v1231, %v1318
  %v1323 = vadd.f32 %v1232, %v1320
  %v1324 = vld [vmem:[%s446] sm:$0xff]
  %v1326 = vsel %vm76, %v1324, 0
  %v1328 = vsel %vm80, %v960, 0
  %v1330 = vsel %vm80, %v962, 0
  %1332 = vmatprep.subr.mxu0 0.0
  %1333 = vmatpush1.msra.mxu0 0.0
  %1334 = vmatprep.subr.mxu0 0.0
  %1335 = vmatpush1.msra.mxu0 0.0
  %1336 = vmatprep.subr.mxu0 0.0
  %1337 = vmatpush1.msra.mxu0 0.0
  %1338 = vmatprep.subr.mxu0 0.0
  %1339 = vmatpush1.msra.mxu0 0.0
  %1340 = vmatprep.subr.mxu0 0.0
  %1341 = vmatpush1.msra.mxu0 0.0
  %1342 = vmatprep.subr.mxu0 0.0
  %1343 = vmatpush1.msra.mxu0 0.0
  %1344 = vmatprep.subr.mxu0 0.0
  %1345 = vmatpush1.msra.mxu0 0.0
  %1346 = vmatprep.subr.mxu0 0.0
  %1347 = vmatpush1.msra.mxu0 0.0
  %1348 = vmatprep.subr.mxu0 0.0
  %1349 = vmatpush1.msra.mxu0 0.0
  %1350 = vmatprep.subr.mxu0 0.0
  %1351 = vmatpush1.msra.mxu0 0.0
  %1352 = vmatprep.subr.mxu0 0.0
  %1353 = vmatpush1.msra.mxu0 0.0
  %1354 = vmatprep.subr.mxu0 0.0
  %1355 = vmatpush1.msra.mxu0 0.0
  %1356 = vmatprep.subr.mxu0 0.0
  %1357 = vmatpush1.msra.mxu0 0.0
  %1358 = vmatprep.subr.mxu0 0.0
  %1359 = vmatpush1.msra.mxu0 0.0
  %1360 = vmatprep.subr.mxu0 0.0
  %1361 = vmatpush1.msra.mxu0 0.0
  %1362 = vmatprep.subr.mxu0 %v1330
  %1363 = vmatpush1.msra.mxu0 %v1328
  %1364 = vmatprep.subr.mxu0 0.0
  %1365 = vmatpush2.msra.mxu0 0.0
  %1366 = vmatprep.subr.mxu0 0.0
  %1367 = vmatpush2.msra.mxu0 0.0
  %1368 = vmatprep.subr.mxu0 0.0
  %1369 = vmatpush2.msra.mxu0 0.0
  %1370 = vmatprep.subr.mxu0 0.0
  %1371 = vmatpush2.msra.mxu0 0.0
  %1372 = vmatprep.subr.mxu0 0.0
  %1373 = vmatpush2.msra.mxu0 0.0
  %1374 = vmatprep.subr.mxu0 0.0
  %1375 = vmatpush2.msra.mxu0 0.0
  %1376 = vmatprep.subr.mxu0 0.0
  %1377 = vmatpush2.msra.mxu0 0.0
  %1378 = vmatprep.subr.mxu0 0.0
  %1379 = vmatpush2.msra.mxu0 0.0
  %1380 = vmatprep.subr.mxu0 0.0
  %1381 = vmatpush2.msra.mxu0 0.0
  %1382 = vmatprep.subr.mxu0 0.0
  %1383 = vmatpush2.msra.mxu0 0.0
  %1384 = vmatprep.subr.mxu0 0.0
  %1385 = vmatpush2.msra.mxu0 0.0
  %1386 = vmatprep.subr.mxu0 0.0
  %1387 = vmatpush2.msra.mxu0 0.0
  %1388 = vmatprep.subr.mxu0 0.0
  %1389 = vmatpush2.msra.mxu0 0.0
  %1390 = vmatprep.subr.mxu0 0.0
  %1391 = vmatpush2.msra.mxu0 0.0
  %1392 = vmatprep.subr.mxu0 0.0
  %1393 = vmatpush2.msra.mxu0 0.0
  %1394 = vmatprep.subr.mxu0 0.0
  %1395 = vmatpush2.msra.mxu0 0.0
  %1396 = vmatprep.mubr.f32.mxu0 0.0
  %1397 = vmatmul.mubr.f32.gmra.mxu0 %v1326
  %v1398 = vpop.f32.mrf.mxu0
  %v1399 = vadd.f32 0.0, %v1398
  %v1400 = vpop.f32.mrf.mxu0
  %v1401 = vadd.f32 0.0, %v1400
  %1402 = vdwg.mxu0
  %v1403 = vadd.f32 %v1322, %v1399
  %v1404 = vadd.f32 %v1323, %v1401
  %1405 = vrot.lane.b32.xlu0 %v960, 127
  %v1406 = vpop.permute.xlu0 %1405
  %1407 = vrot.lane.b32.xlu0 %v962, 127
  %v1408 = vpop.permute.xlu0 %1407
  %v1409 = vsel %vm532, %v1406, %v1408
  %v1410 = vsel %vm532, %v1408, %v1406
  %v1411 = vsel %vm544, %v1409, 0.0
  %v1412 = vsel %vm545, %v1410, 0.0
  %v1413 = vld [vmem:[%s548] sm:$0xff]
  %v1415 = vsel %vm76, %v1413, 0
  %v1418 = vsel %vm80, %v1411, 0
  %v1421 = vsel %vm80, %v1412, 0
  %1423 = vmatprep.subr.mxu0 0.0
  %1424 = vmatpush1.msra.mxu0 0.0
  %1425 = vmatprep.subr.mxu0 0.0
  %1426 = vmatpush1.msra.mxu0 0.0
  %1427 = vmatprep.subr.mxu0 0.0
  %1428 = vmatpush1.msra.mxu0 0.0
  %1429 = vmatprep.subr.mxu0 0.0
  %1430 = vmatpush1.msra.mxu0 0.0
  %1431 = vmatprep.subr.mxu0 0.0
  %1432 = vmatpush1.msra.mxu0 0.0
  %1433 = vmatprep.subr.mxu0 0.0
  %1434 = vmatpush1.msra.mxu0 0.0
  %1435 = vmatprep.subr.mxu0 0.0
  %1436 = vmatpush1.msra.mxu0 0.0
  %1437 = vmatprep.subr.mxu0 0.0
  %1438 = vmatpush1.msra.mxu0 0.0
  %1439 = vmatprep.subr.mxu0 0.0
  %1440 = vmatpush1.msra.mxu0 0.0
  %1441 = vmatprep.subr.mxu0 0.0
  %1442 = vmatpush1.msra.mxu0 0.0
  %1443 = vmatprep.subr.mxu0 0.0
  %1444 = vmatpush1.msra.mxu0 0.0
  %1445 = vmatprep.subr.mxu0 0.0
  %1446 = vmatpush1.msra.mxu0 0.0
  %1447 = vmatprep.subr.mxu0 0.0
  %1448 = vmatpush1.msra.mxu0 0.0
  %1449 = vmatprep.subr.mxu0 0.0
  %1450 = vmatpush1.msra.mxu0 0.0
  %1451 = vmatprep.subr.mxu0 0.0
  %1452 = vmatpush1.msra.mxu0 0.0
  %1453 = vmatprep.subr.mxu0 %v1421
  %1454 = vmatpush1.msra.mxu0 %v1418
  %1455 = vmatprep.subr.mxu0 0.0
  %1456 = vmatpush2.msra.mxu0 0.0
  %1457 = vmatprep.subr.mxu0 0.0
  %1458 = vmatpush2.msra.mxu0 0.0
  %1459 = vmatprep.subr.mxu0 0.0
  %1460 = vmatpush2.msra.mxu0 0.0
  %1461 = vmatprep.subr.mxu0 0.0
  %1462 = vmatpush2.msra.mxu0 0.0
  %1463 = vmatprep.subr.mxu0 0.0
  %1464 = vmatpush2.msra.mxu0 0.0
  %1465 = vmatprep.subr.mxu0 0.0
  %1466 = vmatpush2.msra.mxu0 0.0
  %1467 = vmatprep.subr.mxu0 0.0
  %1468 = vmatpush2.msra.mxu0 0.0
  %1469 = vmatprep.subr.mxu0 0.0
  %1470 = vmatpush2.msra.mxu0 0.0
  %1471 = vmatprep.subr.mxu0 0.0
  %1472 = vmatpush2.msra.mxu0 0.0
  %1473 = vmatprep.subr.mxu0 0.0
  %1474 = vmatpush2.msra.mxu0 0.0
  %1475 = vmatprep.subr.mxu0 0.0
  %1476 = vmatpush2.msra.mxu0 0.0
  %1477 = vmatprep.subr.mxu0 0.0
  %1478 = vmatpush2.msra.mxu0 0.0
  %1479 = vmatprep.subr.mxu0 0.0
  %1480 = vmatpush2.msra.mxu0 0.0
  %1481 = vmatprep.subr.mxu0 0.0
  %1482 = vmatpush2.msra.mxu0 0.0
  %1483 = vmatprep.subr.mxu0 0.0
  %1484 = vmatpush2.msra.mxu0 0.0
  %1485 = vmatprep.subr.mxu0 0.0
  %1486 = vmatpush2.msra.mxu0 0.0
  %1487 = vmatprep.mubr.f32.mxu0 0.0
  %1488 = vmatmul.mubr.f32.gmra.mxu0 %v1415
  %v1489 = vpop.f32.mrf.mxu0
  %v1490 = vadd.f32 0.0, %v1489
  %v1491 = vpop.f32.mrf.mxu0
  %v1492 = vadd.f32 0.0, %v1491
  %1493 = vdwg.mxu0
  %v1494 = vadd.f32 %v1403, %v1490
  %v1495 = vadd.f32 %v1404, %v1492
  %1496 = vrot.lane.b32.xlu0 %v960, 113
  %v1497 = vpop.permute.xlu0 %1496
  %1498 = vrot.lane.b32.xlu0 %v962, 113
  %v1499 = vpop.permute.xlu0 %1498
  %v1500 = vsel %vm636, %v1497, %v1499
  %v1501 = vsel %vm636, %v1499, %v1497
  %v1502 = vsel %vm648, %v1500, 0.0
  %v1503 = vsel %vm649, %v1501, 0.0
  %v1504 = vld [vmem:[%s652] sm:$0xff]
  %v1506 = vsel %vm76, %v1504, 0
  %v1509 = vsel %vm80, %v1502, 0
  %v1512 = vsel %vm80, %v1503, 0
  %1514 = vmatprep.subr.mxu0 0.0
  %1515 = vmatpush1.msra.mxu0 0.0
  %1516 = vmatprep.subr.mxu0 0.0
  %1517 = vmatpush1.msra.mxu0 0.0
  %1518 = vmatprep.subr.mxu0 0.0
  %1519 = vmatpush1.msra.mxu0 0.0
  %1520 = vmatprep.subr.mxu0 0.0
  %1521 = vmatpush1.msra.mxu0 0.0
  %1522 = vmatprep.subr.mxu0 0.0
  %1523 = vmatpush1.msra.mxu0 0.0
  %1524 = vmatprep.subr.mxu0 0.0
  %1525 = vmatpush1.msra.mxu0 0.0
  %1526 = vmatprep.subr.mxu0 0.0
  %1527 = vmatpush1.msra.mxu0 0.0
  %1528 = vmatprep.subr.mxu0 0.0
  %1529 = vmatpush1.msra.mxu0 0.0
  %1530 = vmatprep.subr.mxu0 0.0
  %1531 = vmatpush1.msra.mxu0 0.0
  %1532 = vmatprep.subr.mxu0 0.0
  %1533 = vmatpush1.msra.mxu0 0.0
  %1534 = vmatprep.subr.mxu0 0.0
  %1535 = vmatpush1.msra.mxu0 0.0
  %1536 = vmatprep.subr.mxu0 0.0
  %1537 = vmatpush1.msra.mxu0 0.0
  %1538 = vmatprep.subr.mxu0 0.0
  %1539 = vmatpush1.msra.mxu0 0.0
  %1540 = vmatprep.subr.mxu0 0.0
  %1541 = vmatpush1.msra.mxu0 0.0
  %1542 = vmatprep.subr.mxu0 0.0
  %1543 = vmatpush1.msra.mxu0 0.0
  %1544 = vmatprep.subr.mxu0 %v1512
  %1545 = vmatpush1.msra.mxu0 %v1509
  %1546 = vmatprep.subr.mxu0 0.0
  %1547 = vmatpush2.msra.mxu0 0.0
  %1548 = vmatprep.subr.mxu0 0.0
  %1549 = vmatpush2.msra.mxu0 0.0
  %1550 = vmatprep.subr.mxu0 0.0
  %1551 = vmatpush2.msra.mxu0 0.0
  %1552 = vmatprep.subr.mxu0 0.0
  %1553 = vmatpush2.msra.mxu0 0.0
  %1554 = vmatprep.subr.mxu0 0.0
  %1555 = vmatpush2.msra.mxu0 0.0
  %1556 = vmatprep.subr.mxu0 0.0
  %1557 = vmatpush2.msra.mxu0 0.0
  %1558 = vmatprep.subr.mxu0 0.0
  %1559 = vmatpush2.msra.mxu0 0.0
  %1560 = vmatprep.subr.mxu0 0.0
  %1561 = vmatpush2.msra.mxu0 0.0
  %1562 = vmatprep.subr.mxu0 0.0
  %1563 = vmatpush2.msra.mxu0 0.0
  %1564 = vmatprep.subr.mxu0 0.0
  %1565 = vmatpush2.msra.mxu0 0.0
  %1566 = vmatprep.subr.mxu0 0.0
  %1567 = vmatpush2.msra.mxu0 0.0
  %1568 = vmatprep.subr.mxu0 0.0
  %1569 = vmatpush2.msra.mxu0 0.0
  %1570 = vmatprep.subr.mxu0 0.0
  %1571 = vmatpush2.msra.mxu0 0.0
  %1572 = vmatprep.subr.mxu0 0.0
  %1573 = vmatpush2.msra.mxu0 0.0
  %1574 = vmatprep.subr.mxu0 0.0
  %1575 = vmatpush2.msra.mxu0 0.0
  %1576 = vmatprep.subr.mxu0 0.0
  %1577 = vmatpush2.msra.mxu0 0.0
  %1578 = vmatprep.mubr.f32.mxu0 0.0
  %1579 = vmatmul.mubr.f32.gmra.mxu0 %v1506
  %v1580 = vpop.f32.mrf.mxu0
  %v1581 = vadd.f32 0.0, %v1580
  %v1582 = vpop.f32.mrf.mxu0
  %v1583 = vadd.f32 0.0, %v1582
  %1584 = vdwg.mxu0
  %v1585 = vadd.f32 %v1494, %v1581
  %v1586 = vadd.f32 %v1495, %v1583
  %1587 = vrot.lane.b32.xlu0 %v960, 112
  %v1588 = vpop.permute.xlu0 %1587
  %1589 = vrot.lane.b32.xlu0 %v962, 112
  %v1590 = vpop.permute.xlu0 %1589
  %v1591 = vsel %vm740, %v1588, %v1590
  %v1592 = vsel %vm740, %v1590, %v1588
  %v1593 = vsel %vm752, %v1591, 0.0
  %v1594 = vsel %vm753, %v1592, 0.0
  %v1595 = vld [vmem:[%s756] sm:$0xff]
  %v1597 = vsel %vm76, %v1595, 0
  %v1600 = vsel %vm80, %v1593, 0
  %v1603 = vsel %vm80, %v1594, 0
  %1605 = vmatprep.subr.mxu0 0.0
  %1606 = vmatpush1.msra.mxu0 0.0
  %1607 = vmatprep.subr.mxu0 0.0
  %1608 = vmatpush1.msra.mxu0 0.0
  %1609 = vmatprep.subr.mxu0 0.0
  %1610 = vmatpush1.msra.mxu0 0.0
  %1611 = vmatprep.subr.mxu0 0.0
  %1612 = vmatpush1.msra.mxu0 0.0
  %1613 = vmatprep.subr.mxu0 0.0
  %1614 = vmatpush1.msra.mxu0 0.0
  %1615 = vmatprep.subr.mxu0 0.0
  %1616 = vmatpush1.msra.mxu0 0.0
  %1617 = vmatprep.subr.mxu0 0.0
  %1618 = vmatpush1.msra.mxu0 0.0
  %1619 = vmatprep.subr.mxu0 0.0
  %1620 = vmatpush1.msra.mxu0 0.0
  %1621 = vmatprep.subr.mxu0 0.0
  %1622 = vmatpush1.msra.mxu0 0.0
  %1623 = vmatprep.subr.mxu0 0.0
  %1624 = vmatpush1.msra.mxu0 0.0
  %1625 = vmatprep.subr.mxu0 0.0
  %1626 = vmatpush1.msra.mxu0 0.0
  %1627 = vmatprep.subr.mxu0 0.0
  %1628 = vmatpush1.msra.mxu0 0.0
  %1629 = vmatprep.subr.mxu0 0.0
  %1630 = vmatpush1.msra.mxu0 0.0
  %1631 = vmatprep.subr.mxu0 0.0
  %1632 = vmatpush1.msra.mxu0 0.0
  %1633 = vmatprep.subr.mxu0 0.0
  %1634 = vmatpush1.msra.mxu0 0.0
  %1635 = vmatprep.subr.mxu0 %v1603
  %1636 = vmatpush1.msra.mxu0 %v1600
  %1637 = vmatprep.subr.mxu0 0.0
  %1638 = vmatpush2.msra.mxu0 0.0
  %1639 = vmatprep.subr.mxu0 0.0
  %1640 = vmatpush2.msra.mxu0 0.0
  %1641 = vmatprep.subr.mxu0 0.0
  %1642 = vmatpush2.msra.mxu0 0.0
  %1643 = vmatprep.subr.mxu0 0.0
  %1644 = vmatpush2.msra.mxu0 0.0
  %1645 = vmatprep.subr.mxu0 0.0
  %1646 = vmatpush2.msra.mxu0 0.0
  %1647 = vmatprep.subr.mxu0 0.0
  %1648 = vmatpush2.msra.mxu0 0.0
  %1649 = vmatprep.subr.mxu0 0.0
  %1650 = vmatpush2.msra.mxu0 0.0
  %1651 = vmatprep.subr.mxu0 0.0
  %1652 = vmatpush2.msra.mxu0 0.0
  %1653 = vmatprep.subr.mxu0 0.0
  %1654 = vmatpush2.msra.mxu0 0.0
  %1655 = vmatprep.subr.mxu0 0.0
  %1656 = vmatpush2.msra.mxu0 0.0
  %1657 = vmatprep.subr.mxu0 0.0
  %1658 = vmatpush2.msra.mxu0 0.0
  %1659 = vmatprep.subr.mxu0 0.0
  %1660 = vmatpush2.msra.mxu0 0.0
  %1661 = vmatprep.subr.mxu0 0.0
  %1662 = vmatpush2.msra.mxu0 0.0
  %1663 = vmatprep.subr.mxu0 0.0
  %1664 = vmatpush2.msra.mxu0 0.0
  %1665 = vmatprep.subr.mxu0 0.0
  %1666 = vmatpush2.msra.mxu0 0.0
  %1667 = vmatprep.subr.mxu0 0.0
  %1668 = vmatpush2.msra.mxu0 0.0
  %1669 = vmatprep.mubr.f32.mxu0 0.0
  %1670 = vmatmul.mubr.f32.gmra.mxu0 %v1597
  %v1671 = vpop.f32.mrf.mxu0
  %v1672 = vadd.f32 0.0, %v1671
  %v1673 = vpop.f32.mrf.mxu0
  %v1674 = vadd.f32 0.0, %v1673
  %1675 = vdwg.mxu0
  %v1676 = vadd.f32 %v1585, %v1672
  %v1677 = vadd.f32 %v1586, %v1674
  %1678 = vrot.lane.b32.xlu0 %v960, 111
  %v1679 = vpop.permute.xlu0 %1678
  %1680 = vrot.lane.b32.xlu0 %v962, 111
  %v1681 = vpop.permute.xlu0 %1680
  %v1682 = vsel %vm844, %v1679, %v1681
  %v1683 = vsel %vm844, %v1681, %v1679
  %v1684 = vsel %vm856, %v1682, 0.0
  %v1685 = vsel %vm857, %v1683, 0.0
  %v1686 = vld [vmem:[%s860] sm:$0xff]
  %v1688 = vsel %vm76, %v1686, 0
  %v1691 = vsel %vm80, %v1684, 0
  %v1694 = vsel %vm80, %v1685, 0
  %1696 = vmatprep.subr.mxu0 0.0
  %1697 = vmatpush1.msra.mxu0 0.0
  %1698 = vmatprep.subr.mxu0 0.0
  %1699 = vmatpush1.msra.mxu0 0.0
  %1700 = vmatprep.subr.mxu0 0.0
  %1701 = vmatpush1.msra.mxu0 0.0
  %1702 = vmatprep.subr.mxu0 0.0
  %1703 = vmatpush1.msra.mxu0 0.0
  %1704 = vmatprep.subr.mxu0 0.0
  %1705 = vmatpush1.msra.mxu0 0.0
  %1706 = vmatprep.subr.mxu0 0.0
  %1707 = vmatpush1.msra.mxu0 0.0
  %1708 = vmatprep.subr.mxu0 0.0
  %1709 = vmatpush1.msra.mxu0 0.0
  %1710 = vmatprep.subr.mxu0 0.0
  %1711 = vmatpush1.msra.mxu0 0.0
  %1712 = vmatprep.subr.mxu0 0.0
  %1713 = vmatpush1.msra.mxu0 0.0
  %1714 = vmatprep.subr.mxu0 0.0
  %1715 = vmatpush1.msra.mxu0 0.0
  %1716 = vmatprep.subr.mxu0 0.0
  %1717 = vmatpush1.msra.mxu0 0.0
  %1718 = vmatprep.subr.mxu0 0.0
  %1719 = vmatpush1.msra.mxu0 0.0
  %1720 = vmatprep.subr.mxu0 0.0
  %1721 = vmatpush1.msra.mxu0 0.0
  %1722 = vmatprep.subr.mxu0 0.0
  %1723 = vmatpush1.msra.mxu0 0.0
  %1724 = vmatprep.subr.mxu0 0.0
  %1725 = vmatpush1.msra.mxu0 0.0
  %1726 = vmatprep.subr.mxu0 %v1694
  %1727 = vmatpush1.msra.mxu0 %v1691
  %1728 = vmatprep.subr.mxu0 0.0
  %1729 = vmatpush2.msra.mxu0 0.0
  %1730 = vmatprep.subr.mxu0 0.0
  %1731 = vmatpush2.msra.mxu0 0.0
  %1732 = vmatprep.subr.mxu0 0.0
  %1733 = vmatpush2.msra.mxu0 0.0
  %1734 = vmatprep.subr.mxu0 0.0
  %1735 = vmatpush2.msra.mxu0 0.0
  %1736 = vmatprep.subr.mxu0 0.0
  %1737 = vmatpush2.msra.mxu0 0.0
  %1738 = vmatprep.subr.mxu0 0.0
  %1739 = vmatpush2.msra.mxu0 0.0
  %1740 = vmatprep.subr.mxu0 0.0
  %1741 = vmatpush2.msra.mxu0 0.0
  %1742 = vmatprep.subr.mxu0 0.0
  %1743 = vmatpush2.msra.mxu0 0.0
  %1744 = vmatprep.subr.mxu0 0.0
  %1745 = vmatpush2.msra.mxu0 0.0
  %1746 = vmatprep.subr.mxu0 0.0
  %1747 = vmatpush2.msra.mxu0 0.0
  %1748 = vmatprep.subr.mxu0 0.0
  %1749 = vmatpush2.msra.mxu0 0.0
  %1750 = vmatprep.subr.mxu0 0.0
  %1751 = vmatpush2.msra.mxu0 0.0
  %1752 = vmatprep.subr.mxu0 0.0
  %1753 = vmatpush2.msra.mxu0 0.0
  %1754 = vmatprep.subr.mxu0 0.0
  %1755 = vmatpush2.msra.mxu0 0.0
  %1756 = vmatprep.subr.mxu0 0.0
  %1757 = vmatpush2.msra.mxu0 0.0
  %1758 = vmatprep.subr.mxu0 0.0
  %1759 = vmatpush2.msra.mxu0 0.0
  %1760 = vmatprep.mubr.f32.mxu0 0.0
  %1761 = vmatmul.mubr.f32.gmra.mxu0 %v1688
  %v1762 = vpop.f32.mrf.mxu0
  %v1763 = vadd.f32 0.0, %v1762
  %v1764 = vpop.f32.mrf.mxu0
  %v1765 = vadd.f32 0.0, %v1764
  %1766 = vdwg.mxu0
  %v1767 = vadd.f32 %v1676, %v1763
  %v1768 = vadd.f32 %v1677, %v1765
  %v1769 = vadd.f32 %v1767, %v1768
  %1770 = vadd.xlane.f32.xlu0 %v1769
  %v1771 = vpop.xlane.xlu0 %1770
  %v1772 = vmul.f32 %v1771, 0.00390625
  %v1773 = vsub.f32 %v1767, %v1772
  %v1774 = vsub.f32 %v1768, %v1772
  %v1775 = vmul.f32 %v1773, %v1773
  %v1776 = vmul.f32 %v1774, %v1774
  %v1777 = vadd.f32 %v1775, %v1776
  %1778 = vadd.xlane.f32.xlu0 %v1777
  %v1779 = vpop.xlane.xlu0 %1778
  %v1780 = vsel %vm955, %v1771, %v1779
  %s1781 = scalar_lea.vmem %s4, 8
  %1782 = vst.msk [vmem:[%s1781] sm:$0xff] %vm957, %v1780
  // Predicated region
  $region18: #{tpu_custom_call.1} parent=0 // pred_check
    _
  $region19: #{tpu_custom_call.1} parent=0 // pred_check_branch
    %1784 = sbr.rel (0) target = $region21
  $region20: #{tpu_custom_call.1} parent=0 // pred_region
    _
  $region21: #{tpu_custom_call.1} parent=0 // pred_fallthru
    _
  // Predicated region
  $region22: #{tpu_custom_call.1} parent=0 // pred_check
    _
  $region23: #{tpu_custom_call.1} parent=0 // pred_check_branch
    %1786 = sbr.rel (0) target = $region25
  $region24: #{tpu_custom_call.1} parent=0 // pred_region
    _
  $region25: #{tpu_custom_call.1} parent=0 // pred_fallthru
    _

</llo_original>
